<compile_context>
chip_gen: v5e
topology: v5e:2x2
jax: 0.10.0
libtpu: 0.0.40
codegen_flags: <defaults>
</compile_context>

<pallas_src>
import math
import functools

import jax
import jax.numpy as jnp
from jax.experimental import pallas as pl
from jax.experimental.pallas import tpu as pltpu


def _round_up(a, b):
    return -(-a // b) * b


def _vmem_limit_bytes():
    cap = 64 * 1024 * 1024
    try:
        cap = int(pltpu.get_tpu_info().vmem_capacity_bytes)
    except Exception:
        pass
    return int(min(cap * 7 // 10, 96 * 1024 * 1024))


# ----------------------------- Pallas kernel ------------------------------ #
def _conv_kernel(x_ref, w_ref, o_ref, *, KH, KW, sh, sw, TR, OW, WPP, TM):
    """One (batch, row-block) step of the fused conv.

    x_ref: (HP, C_pad, LW)        bf16  full packed image of this batch element
                                        (W on lanes, phase de-interleaved if sw>1)
    w_ref: (OC_pad, KH*KW*C_pad)  bf16  full weight matrix, resident
    o_ref: (OC_pad, TR, OW)       f32   output rows [r*TR, r*TR+TR), NCHW layout
    """
    r = pl.program_id(1)
    row_start = r * (TR * sh)
    n_mt = w_ref.shape[0] // TM

    for t in range(TR):                                   # static unroll, TR <= 32
        # Build im2col patch (KH*KW*C_pad, OW) for output row t:
        # sublane-concat of KH*KW contiguous lane windows of the row tiles.
        blocks = []
        for kh in range(KH):
            row = x_ref[row_start + t * sh + kh]          # (C_pad, LW)
            for kw in range(KW):
                start = (kw % sw) * WPP + (kw // sw)      # contiguous lane window
                blocks.append(row[:, start:start + OW])   # (C_pad, OW)
        patch = blocks[0] if len(blocks) == 1 else jnp.concatenate(blocks, axis=0)

        # One MXU matmul per oc tile: (TM, K) @ (K, OW), K = KH*KW*C_pad.
        for m in range(n_mt):
            res = jnp.dot(w_ref[m * TM:(m + 1) * TM, :], patch,
                          preferred_element_type=jnp.float32)     # (TM, OW) f32
            o_ref[m * TM:(m + 1) * TM, t, :] = res.astype(o_ref.dtype)


# ------------------------------ forward glue ------------------------------ #
@functools.partial(jax.jit, static_argnames=("stride", "padding"))
def conv2d_forward(x, weight, stride, padding):
    """x: (B, C, H, W) NCHW;  weight: (OC, C, KH, KW)  ->  (B, OC, OH, OW)."""
    B, C, H, W = x.shape
    OC, _, KH, KW = weight.shape
    sh, sw = stride
    ph, pw = padding

    OH = (H + 2 * ph - KH) // sh + 1
    OW = (W + 2 * pw - KW) // sw + 1

    # ---- layout / tile parameters ----
    C_pad = _round_up(C, 8)              # channels live on sublanes
    WP_raw = W + 2 * pw
    WPP = -(-WP_raw // sw)               # per-phase width
    LW = sw * WPP                        # lane width of the packed image
    Kdim = KH * KW * C_pad               # fused GEMM reduction depth

    # output rows per grid step (static unroll in-kernel)
    TR_target = max(1, min(32, 2048 // max(OW, 1)))
    if OH <= max(TR_target, 8):
        TR, n_rb, OH_pad = OH, 1, OH
    else:
        TR = max(8, (min(TR_target, OH) // 8) * 8)
        n_rb = pl.cdiv(OH, TR)
        OH_pad = n_rb * TR

    HP_need = (OH_pad - 1) * sh + KH
    HP = max(H + 2 * ph, HP_need)

    # oc tile (GEMM M axis): keep the per-dot f32 result tile <= ~128 KiB
    TM_target = max(8, min(OC, (128 * 1024) // (4 * max(OW, 1))))
    n_mt = pl.cdiv(OC, TM_target)
    TM = _round_up(-(-OC // n_mt), 8)
    OC_pad = TM * n_mt

    # ---- glue: NCHW -> (B, HP, C_pad, LW), zero pads, width-phase packing ----
    x_t = jnp.transpose(x, (0, 2, 1, 3))                           # (B, H, C, W)
    x_p = jnp.pad(x_t, ((0, 0), (ph, HP - H - ph),
                        (0, C_pad - C), (pw, LW - W - pw)))
    if sw > 1:
        # de-interleave width phases so in-kernel slices are contiguous lanes
        x_p = (x_p.reshape(B, HP, C_pad, WPP, sw)
                  .transpose(0, 1, 2, 4, 3)
                  .reshape(B, HP, C_pad, LW))
    x_b = x_p.astype(jnp.bfloat16)

    # weight: (OC, C, KH, KW) -> (OC_pad, KH*KW*C_pad), K index = (kh, kw, c)
    w_t = jnp.transpose(weight, (0, 2, 3, 1))                      # (OC, KH, KW, C)
    w_t = jnp.pad(w_t, ((0, OC_pad - OC), (0, 0), (0, 0), (0, C_pad - C)))
    w_b = w_t.reshape(OC_pad, Kdim).astype(jnp.bfloat16)

    kernel = functools.partial(_conv_kernel, KH=KH, KW=KW, sh=sh, sw=sw,
                               TR=TR, OW=OW, WPP=WPP, TM=TM)

    flops = 2 * B * OH_pad * OW * OC_pad * Kdim
    bytes_accessed = (B * HP * C_pad * LW * 2            # each image read once
                      + OC_pad * Kdim * 2                # weights read once
                      + B * OC_pad * OH_pad * OW * 4)    # output written once

    out = pl.pallas_call(
        kernel,
        out_shape=jax.ShapeDtypeStruct((B, OC_pad, OH_pad, OW), jnp.float32),
        grid=(B, n_rb),
        in_specs=[
            # full packed image of one batch element; block index depends only
            # on b -> DMA'd from HBM once per batch element.
            pl.BlockSpec((None, HP, C_pad, LW), lambda b, r: (b, 0, 0, 0)),
            # full weight matrix, resident for the whole kernel
            pl.BlockSpec((OC_pad, Kdim), lambda b, r: (0, 0)),
        ],
        out_specs=pl.BlockSpec((None, OC_pad, TR, OW),
                               lambda b, r: (b, 0, r, 0)),
        compiler_params=pltpu.CompilerParams(
            dimension_semantics=("parallel", "parallel"),
            vmem_limit_bytes=_vmem_limit_bytes(),
        ),
        cost_estimate=pl.CostEstimate(
            flops=flops, transcendentals=0, bytes_accessed=bytes_accessed),
    )(x_b, w_b)

    out = out[:, :OC, :OH, :]            # drop oc / row padding (already NCHW)
    return out.astype(x.dtype)


# ------------------------------ Conv2d module ----------------------------- #
class Conv2dPallas:
    """Mirrors net.py::Conv2d forward: F.conv2d(x, mask*weight, stride, padding).

    Weight stored flat (N = OC*C*K*K), multiplied by an all-ones mask, viewed
    as (OC, C, K, K).  bias=None; dilation/groups are unused in the reference
    forward (as in the original module).
    """

    def __init__(self, in_channels, out_channels, kernel_size,
                 stride=1, padding=0, dilation=1, groups=1, key=None):
        self.in_channels = in_channels
        self.out_channels = out_channels
        self.kernel_size = kernel_size
        self.stride = tuple(stride) if hasattr(stride, "__len__") else (stride, stride)
        self.padding = tuple(padding) if hasattr(padding, "__len__") else (padding, padding)

        N = out_channels * in_channels * kernel_size * kernel_size
        n = kernel_size * kernel_size * out_channels
        key = jax.random.PRNGKey(42) if key is None else key
        # deterministic init: normal(0, sqrt(2/n)), same as .normal_(0, sqrt(2/n))
        self._weight = jax.random.normal(key, (N,), dtype=jnp.float32) * math.sqrt(2.0 / n)
        self._mask = jnp.ones((N,), dtype=jnp.float32)
        # TODO(synk): _quant_idxs/_quant_values scatter branch is inert at init
        # (size 1) in the reference module and is not replicated here.

    @property
    def weight(self):
        w = self._mask * self._weight
        K = self.kernel_size
        return w.reshape(self.out_channels, self.in_channels, K, K)

    def __call__(self, x):
        return conv2d_forward(x, self.weight, self.stride, self.padding)


# ---------------------------------- main ----------------------------------- #
if __name__ == "__main__":
    key = jax.random.PRNGKey(0)
    k_x, k_w = jax.random.split(key)

    B, C, H, W = 2, 4, 16, 16
    OC, K, stride, padding = 8, 3, 1, 1

    x = jax.random.normal(k_x, (B, C, H, W), dtype=jnp.float32)

    conv = Conv2dPallas(C, OC, K, stride=stride, padding=padding, key=k_w)
    y = jax.block_until_ready(conv(x))

    # Reference on the same bf16-rounded operands (kernel uses bf16 MXU inputs
    # with f32 accumulation).
    x32 = x.astype(jnp.bfloat16).astype(jnp.float32)
    w32 = conv.weight.astype(jnp.bfloat16).astype(jnp.float32)
    y_ref = jax.lax.conv_general_dilated(
        x32, w32, window_strides=(stride, stride),
        padding=[(padding, padding), (padding, padding)],
        dimension_numbers=("NCHW", "OIHW", "NCHW"),
        precision=jax.lax.Precision.HIGHEST,
    )

    assert y.shape == (B, OC, H, W), y.shape
    assert jnp.allclose(y, y_ref, atol=1e-2, rtol=1e-2), \
        float(jnp.max(jnp.abs(y - y_ref)))

    print("KERNEL_OK")
</pallas_src>

<mosaic_0001>
module attributes {stable_mosaic.version = 11 : i64} {
  func.func @_conv_kernel(%arg0: i32, %arg1: i32, %arg2: memref<1x18x8x18xbf16, #tpu.memory_space<vmem>>, %arg3: memref<8x72xbf16, #tpu.memory_space<vmem>>, %arg4: memref<1x8x16x16xf32, #tpu.memory_space<vmem>>) attributes {dimension_semantics = [#tpu.dimension_semantics<parallel>, #tpu.dimension_semantics<parallel>], iteration_bounds = array<i64: 2, 1>, scalar_prefetch = 0 : i64, scratch_operands = 0 : i64, tpu.core_type = #tpu.core_type<tc>, window_params = [{transform_indices = @transform_0, window_bounds = array<i64: 1, 18, 8, 18>}, {pipeline_mode = #tpu.pipeline_mode<synchronous>, transform_indices = @transform_1, window_bounds = array<i64: 8, 72>}, {transform_indices = @transform_2, window_bounds = array<i64: 1, 8, 16, 16>}]} {
    %c16_i32 = arith.constant 16 : i32
    %0 = arith.muli %arg1, %c16_i32 : i32
    %c0_i32 = arith.constant 0 : i32
    %1 = arith.addi %0, %c0_i32 : i32
    %c0_i32_0 = arith.constant 0 : i32
    %2 = arith.addi %1, %c0_i32_0 : i32
    %c0 = arith.constant 0 : index
    %3 = arith.index_cast %2 : i32 to index
    %c0_1 = arith.constant 0 : index
    %c0_2 = arith.constant 0 : index
    %4 = vector.load %arg2[%c0, %3, %c0_1, %c0_2] : memref<1x18x8x18xbf16, #tpu.memory_space<vmem>>, vector<1x1x8x18xbf16>
    %5 = vector.shape_cast %4 : vector<1x1x8x18xbf16> to vector<8x18xbf16>
    %6 = vector.extract_strided_slice %5 {offsets = [0, 0], sizes = [8, 16], strides = [1, 1]} : vector<8x18xbf16> to vector<8x16xbf16>
    %7 = vector.extract_strided_slice %5 {offsets = [0, 1], sizes = [8, 16], strides = [1, 1]} : vector<8x18xbf16> to vector<8x16xbf16>
    %8 = vector.extract_strided_slice %5 {offsets = [0, 2], sizes = [8, 16], strides = [1, 1]} : vector<8x18xbf16> to vector<8x16xbf16>
    %c0_i32_3 = arith.constant 0 : i32
    %9 = arith.addi %0, %c0_i32_3 : i32
    %c1_i32 = arith.constant 1 : i32
    %10 = arith.addi %9, %c1_i32 : i32
    %c0_4 = arith.constant 0 : index
    %11 = arith.index_cast %10 : i32 to index
    %c0_5 = arith.constant 0 : index
    %c0_6 = arith.constant 0 : index
    %12 = vector.load %arg2[%c0_4, %11, %c0_5, %c0_6] : memref<1x18x8x18xbf16, #tpu.memory_space<vmem>>, vector<1x1x8x18xbf16>
    %13 = vector.shape_cast %12 : vector<1x1x8x18xbf16> to vector<8x18xbf16>
    %14 = vector.extract_strided_slice %13 {offsets = [0, 0], sizes = [8, 16], strides = [1, 1]} : vector<8x18xbf16> to vector<8x16xbf16>
    %15 = vector.extract_strided_slice %13 {offsets = [0, 1], sizes = [8, 16], strides = [1, 1]} : vector<8x18xbf16> to vector<8x16xbf16>
    %16 = vector.extract_strided_slice %13 {offsets = [0, 2], sizes = [8, 16], strides = [1, 1]} : vector<8x18xbf16> to vector<8x16xbf16>
    %c0_i32_7 = arith.constant 0 : i32
    %17 = arith.addi %0, %c0_i32_7 : i32
    %c2_i32 = arith.constant 2 : i32
    %18 = arith.addi %17, %c2_i32 : i32
    %c0_8 = arith.constant 0 : index
    %19 = arith.index_cast %18 : i32 to index
    %c0_9 = arith.constant 0 : index
    %c0_10 = arith.constant 0 : index
    %20 = vector.load %arg2[%c0_8, %19, %c0_9, %c0_10] : memref<1x18x8x18xbf16, #tpu.memory_space<vmem>>, vector<1x1x8x18xbf16>
    %21 = vector.shape_cast %20 : vector<1x1x8x18xbf16> to vector<8x18xbf16>
    %22 = vector.extract_strided_slice %21 {offsets = [0, 0], sizes = [8, 16], strides = [1, 1]} : vector<8x18xbf16> to vector<8x16xbf16>
    %23 = vector.extract_strided_slice %21 {offsets = [0, 1], sizes = [8, 16], strides = [1, 1]} : vector<8x18xbf16> to vector<8x16xbf16>
    %24 = vector.extract_strided_slice %21 {offsets = [0, 2], sizes = [8, 16], strides = [1, 1]} : vector<8x18xbf16> to vector<8x16xbf16>
    %25 = tpu.concatenate %6, %7, %8, %14, %15, %16, %22, %23, %24 in 0 : vector<8x16xbf16>, vector<8x16xbf16>, vector<8x16xbf16>, vector<8x16xbf16>, vector<8x16xbf16>, vector<8x16xbf16>, vector<8x16xbf16>, vector<8x16xbf16>, vector<8x16xbf16> -> vector<72x16xbf16>
    %c0_11 = arith.constant 0 : index
    %c0_12 = arith.constant 0 : index
    %26 = vector.load %arg3[%c0_11, %c0_12] : memref<8x72xbf16, #tpu.memory_space<vmem>>, vector<8x72xbf16>
    %cst = arith.constant dense<0.000000e+00> : vector<8x16xf32>
    %27 = tpu.matmul %26, %25, %cst {dimension_numbers = #tpu.dot_dimension_numbers<[1], [0], [0], [1], [0, 0, 1, 1], [], []>} : vector<8x72xbf16>, vector<72x16xbf16>, vector<8x16xf32> -> vector<8x16xf32>
    %c0_13 = arith.constant 0 : index
    %c0_14 = arith.constant 0 : index
    %c0_15 = arith.constant 0 : index
    %c0_16 = arith.constant 0 : index
    %28 = vector.load %arg4[%c0_13, %c0_14, %c0_15, %c0_16] : memref<1x8x16x16xf32, #tpu.memory_space<vmem>>, vector<1x8x1x16xf32>
    %29 = vector.shape_cast %28 : vector<1x8x1x16xf32> to vector<8x16xf32>
    %30 = vector.shape_cast %27 : vector<8x16xf32> to vector<1x8x1x16xf32>
    tpu.vector_store %arg4[%c0_13, %c0_14, %c0_15, %c0_16], %30 {strides = array<i32>} : memref<1x8x16x16xf32, #tpu.memory_space<vmem>>, vector<1x8x1x16xf32>,
    %c1_i32_17 = arith.constant 1 : i32
    %31 = arith.addi %0, %c1_i32_17 : i32
    %c0_i32_18 = arith.constant 0 : i32
    %32 = arith.addi %31, %c0_i32_18 : i32
    %c0_19 = arith.constant 0 : index
    %33 = arith.index_cast %32 : i32 to index
    %c0_20 = arith.constant 0 : index
    %c0_21 = arith.constant 0 : index
    %34 = vector.load %arg2[%c0_19, %33, %c0_20, %c0_21] : memref<1x18x8x18xbf16, #tpu.memory_space<vmem>>, vector<1x1x8x18xbf16>
    %35 = vector.shape_cast %34 : vector<1x1x8x18xbf16> to vector<8x18xbf16>
    %36 = vector.extract_strided_slice %35 {offsets = [0, 0], sizes = [8, 16], strides = [1, 1]} : vector<8x18xbf16> to vector<8x16xbf16>
    %37 = vector.extract_strided_slice %35 {offsets = [0, 1], sizes = [8, 16], strides = [1, 1]} : vector<8x18xbf16> to vector<8x16xbf16>
    %38 = vector.extract_strided_slice %35 {offsets = [0, 2], sizes = [8, 16], strides = [1, 1]} : vector<8x18xbf16> to vector<8x16xbf16>
    %c1_i32_22 = arith.constant 1 : i32
    %39 = arith.addi %0, %c1_i32_22 : i32
    %c1_i32_23 = arith.constant 1 : i32
    %40 = arith.addi %39, %c1_i32_23 : i32
    %c0_24 = arith.constant 0 : index
    %41 = arith.index_cast %40 : i32 to index
    %c0_25 = arith.constant 0 : index
    %c0_26 = arith.constant 0 : index
    %42 = vector.load %arg2[%c0_24, %41, %c0_25, %c0_26] : memref<1x18x8x18xbf16, #tpu.memory_space<vmem>>, vector<1x1x8x18xbf16>
    %43 = vector.shape_cast %42 : vector<1x1x8x18xbf16> to vector<8x18xbf16>
    %44 = vector.extract_strided_slice %43 {offsets = [0, 0], sizes = [8, 16], strides = [1, 1]} : vector<8x18xbf16> to vector<8x16xbf16>
    %45 = vector.extract_strided_slice %43 {offsets = [0, 1], sizes = [8, 16], strides = [1, 1]} : vector<8x18xbf16> to vector<8x16xbf16>
    %46 = vector.extract_strided_slice %43 {offsets = [0, 2], sizes = [8, 16], strides = [1, 1]} : vector<8x18xbf16> to vector<8x16xbf16>
    %c1_i32_27 = arith.constant 1 : i32
    %47 = arith.addi %0, %c1_i32_27 : i32
    %c2_i32_28 = arith.constant 2 : i32
    %48 = arith.addi %47, %c2_i32_28 : i32
    %c0_29 = arith.constant 0 : index
    %49 = arith.index_cast %48 : i32 to index
    %c0_30 = arith.constant 0 : index
    %c0_31 = arith.constant 0 : index
    %50 = vector.load %arg2[%c0_29, %49, %c0_30, %c0_31] : memref<1x18x8x18xbf16, #tpu.memory_space<vmem>>, vector<1x1x8x18xbf16>
    %51 = vector.shape_cast %50 : vector<1x1x8x18xbf16> to vector<8x18xbf16>
    %52 = vector.extract_strided_slice %51 {offsets = [0, 0], sizes = [8, 16], strides = [1, 1]} : vector<8x18xbf16> to vector<8x16xbf16>
    %53 = vector.extract_strided_slice %51 {offsets = [0, 1], sizes = [8, 16], strides = [1, 1]} : vector<8x18xbf16> to vector<8x16xbf16>
    %54 = vector.extract_strided_slice %51 {offsets = [0, 2], sizes = [8, 16], strides = [1, 1]} : vector<8x18xbf16> to vector<8x16xbf16>
    %55 = tpu.concatenate %36, %37, %38, %44, %45, %46, %52, %53, %54 in 0 : vector<8x16xbf16>, vector<8x16xbf16>, vector<8x16xbf16>, vector<8x16xbf16>, vector<8x16xbf16>, vector<8x16xbf16>, vector<8x16xbf16>, vector<8x16xbf16>, vector<8x16xbf16> -> vector<72x16xbf16>
    %c0_32 = arith.constant 0 : index
    %c0_33 = arith.constant 0 : index
    %56 = vector.load %arg3[%c0_32, %c0_33] : memref<8x72xbf16, #tpu.memory_space<vmem>>, vector<8x72xbf16>
    %cst_34 = arith.constant dense<0.000000e+00> : vector<8x16xf32>
    %57 = tpu.matmul %56, %55, %cst_34 {dimension_numbers = #tpu.dot_dimension_numbers<[1], [0], [0], [1], [0, 0, 1, 1], [], []>} : vector<8x72xbf16>, vector<72x16xbf16>, vector<8x16xf32> -> vector<8x16xf32>
    %c0_35 = arith.constant 0 : index
    %c0_36 = arith.constant 0 : index
    %c1 = arith.constant 1 : index
    %c0_37 = arith.constant 0 : index
    %58 = vector.load %arg4[%c0_35, %c0_36, %c1, %c0_37] : memref<1x8x16x16xf32, #tpu.memory_space<vmem>>, vector<1x8x1x16xf32>
    %59 = vector.shape_cast %58 : vector<1x8x1x16xf32> to vector<8x16xf32>
    %60 = vector.shape_cast %57 : vector<8x16xf32> to vector<1x8x1x16xf32>
    tpu.vector_store %arg4[%c0_35, %c0_36, %c1, %c0_37], %60 {strides = array<i32>} : memref<1x8x16x16xf32, #tpu.memory_space<vmem>>, vector<1x8x1x16xf32>,
    %c2_i32_38 = arith.constant 2 : i32
    %61 = arith.addi %0, %c2_i32_38 : i32
    %c0_i32_39 = arith.constant 0 : i32
    %62 = arith.addi %61, %c0_i32_39 : i32
    %c0_40 = arith.constant 0 : index
    %63 = arith.index_cast %62 : i32 to index
    %c0_41 = arith.constant 0 : index
    %c0_42 = arith.constant 0 : index
    %64 = vector.load %arg2[%c0_40, %63, %c0_41, %c0_42] : memref<1x18x8x18xbf16, #tpu.memory_space<vmem>>, vector<1x1x8x18xbf16>
    %65 = vector.shape_cast %64 : vector<1x1x8x18xbf16> to vector<8x18xbf16>
    %66 = vector.extract_strided_slice %65 {offsets = [0, 0], sizes = [8, 16], strides = [1, 1]} : vector<8x18xbf16> to vector<8x16xbf16>
    %67 = vector.extract_strided_slice %65 {offsets = [0, 1], sizes = [8, 16], strides = [1, 1]} : vector<8x18xbf16> to vector<8x16xbf16>
    %68 = vector.extract_strided_slice %65 {offsets = [0, 2], sizes = [8, 16], strides = [1, 1]} : vector<8x18xbf16> to vector<8x16xbf16>
    %c2_i32_43 = arith.constant 2 : i32
    %69 = arith.addi %0, %c2_i32_43 : i32
    %c1_i32_44 = arith.constant 1 : i32
    %70 = arith.addi %69, %c1_i32_44 : i32
    %c0_45 = arith.constant 0 : index
    %71 = arith.index_cast %70 : i32 to index
    %c0_46 = arith.constant 0 : index
    %c0_47 = arith.constant 0 : index
    %72 = vector.load %arg2[%c0_45, %71, %c0_46, %c0_47] : memref<1x18x8x18xbf16, #tpu.memory_space<vmem>>, vector<1x1x8x18xbf16>
    %73 = vector.shape_cast %72 : vector<1x1x8x18xbf16> to vector<8x18xbf16>
    %74 = vector.extract_strided_slice %73 {offsets = [0, 0], sizes = [8, 16], strides = [1, 1]} : vector<8x18xbf16> to vector<8x16xbf16>
    %75 = vector.extract_strided_slice %73 {offsets = [0, 1], sizes = [8, 16], strides = [1, 1]} : vector<8x18xbf16> to vector<8x16xbf16>
    %76 = vector.extract_strided_slice %73 {offsets = [0, 2], sizes = [8, 16], strides = [1, 1]} : vector<8x18xbf16> to vector<8x16xbf16>
    %c2_i32_48 = arith.constant 2 : i32
    %77 = arith.addi %0, %c2_i32_48 : i32
    %c2_i32_49 = arith.constant 2 : i32
    %78 = arith.addi %77, %c2_i32_49 : i32
    %c0_50 = arith.constant 0 : index
    %79 = arith.index_cast %78 : i32 to index
    %c0_51 = arith.constant 0 : index
    %c0_52 = arith.constant 0 : index
    %80 = vector.load %arg2[%c0_50, %79, %c0_51, %c0_52] : memref<1x18x8x18xbf16, #tpu.memory_space<vmem>>, vector<1x1x8x18xbf16>
    %81 = vector.shape_cast %80 : vector<1x1x8x18xbf16> to vector<8x18xbf16>
    %82 = vector.extract_strided_slice %81 {offsets = [0, 0], sizes = [8, 16], strides = [1, 1]} : vector<8x18xbf16> to vector<8x16xbf16>
    %83 = vector.extract_strided_slice %81 {offsets = [0, 1], sizes = [8, 16], strides = [1, 1]} : vector<8x18xbf16> to vector<8x16xbf16>
    %84 = vector.extract_strided_slice %81 {offsets = [0, 2], sizes = [8, 16], strides = [1, 1]} : vector<8x18xbf16> to vector<8x16xbf16>
    %85 = tpu.concatenate %66, %67, %68, %74, %75, %76, %82, %83, %84 in 0 : vector<8x16xbf16>, vector<8x16xbf16>, vector<8x16xbf16>, vector<8x16xbf16>, vector<8x16xbf16>, vector<8x16xbf16>, vector<8x16xbf16>, vector<8x16xbf16>, vector<8x16xbf16> -> vector<72x16xbf16>
    %c0_53 = arith.constant 0 : index
    %c0_54 = arith.constant 0 : index
    %86 = vector.load %arg3[%c0_53, %c0_54] : memref<8x72xbf16, #tpu.memory_space<vmem>>, vector<8x72xbf16>
    %cst_55 = arith.constant dense<0.000000e+00> : vector<8x16xf32>
    %87 = tpu.matmul %86, %85, %cst_55 {dimension_numbers = #tpu.dot_dimension_numbers<[1], [0], [0], [1], [0, 0, 1, 1], [], []>} : vector<8x72xbf16>, vector<72x16xbf16>, vector<8x16xf32> -> vector<8x16xf32>
    %c0_56 = arith.constant 0 : index
    %c0_57 = arith.constant 0 : index
    %c2 = arith.constant 2 : index
    %c0_58 = arith.constant 0 : index
    %88 = vector.load %arg4[%c0_56, %c0_57, %c2, %c0_58] : memref<1x8x16x16xf32, #tpu.memory_space<vmem>>, vector<1x8x1x16xf32>
    %89 = vector.shape_cast %88 : vector<1x8x1x16xf32> to vector<8x16xf32>
    %90 = vector.shape_cast %87 : vector<8x16xf32> to vector<1x8x1x16xf32>
    tpu.vector_store %arg4[%c0_56, %c0_57, %c2, %c0_58], %90 {strides = array<i32>} : memref<1x8x16x16xf32, #tpu.memory_space<vmem>>, vector<1x8x1x16xf32>,
    %c3_i32 = arith.constant 3 : i32
    %91 = arith.addi %0, %c3_i32 : i32
    %c0_i32_59 = arith.constant 0 : i32
    %92 = arith.addi %91, %c0_i32_59 : i32
    %c0_60 = arith.constant 0 : index
    %93 = arith.index_cast %92 : i32 to index
    %c0_61 = arith.constant 0 : index
    %c0_62 = arith.constant 0 : index
    %94 = vector.load %arg2[%c0_60, %93, %c0_61, %c0_62] : memref<1x18x8x18xbf16, #tpu.memory_space<vmem>>, vector<1x1x8x18xbf16>
    %95 = vector.shape_cast %94 : vector<1x1x8x18xbf16> to vector<8x18xbf16>
    %96 = vector.extract_strided_slice %95 {offsets = [0, 0], sizes = [8, 16], strides = [1, 1]} : vector<8x18xbf16> to vector<8x16xbf16>
    %97 = vector.extract_strided_slice %95 {offsets = [0, 1], sizes = [8, 16], strides = [1, 1]} : vector<8x18xbf16> to vector<8x16xbf16>
    %98 = vector.extract_strided_slice %95 {offsets = [0, 2], sizes = [8, 16], strides = [1, 1]} : vector<8x18xbf16> to vector<8x16xbf16>
    %c3_i32_63 = arith.constant 3 : i32
    %99 = arith.addi %0, %c3_i32_63 : i32
    %c1_i32_64 = arith.constant 1 : i32
    %100 = arith.addi %99, %c1_i32_64 : i32
    %c0_65 = arith.constant 0 : index
    %101 = arith.index_cast %100 : i32 to index
    %c0_66 = arith.constant 0 : index
    %c0_67 = arith.constant 0 : index
    %102 = vector.load %arg2[%c0_65, %101, %c0_66, %c0_67] : memref<1x18x8x18xbf16, #tpu.memory_space<vmem>>, vector<1x1x8x18xbf16>
    %103 = vector.shape_cast %102 : vector<1x1x8x18xbf16> to vector<8x18xbf16>
    %104 = vector.extract_strided_slice %103 {offsets = [0, 0], sizes = [8, 16], strides = [1, 1]} : vector<8x18xbf16> to vector<8x16xbf16>
    %105 = vector.extract_strided_slice %103 {offsets = [0, 1], sizes = [8, 16], strides = [1, 1]} : vector<8x18xbf16> to vector<8x16xbf16>
    %106 = vector.extract_strided_slice %103 {offsets = [0, 2], sizes = [8, 16], strides = [1, 1]} : vector<8x18xbf16> to vector<8x16xbf16>
    %c3_i32_68 = arith.constant 3 : i32
    %107 = arith.addi %0, %c3_i32_68 : i32
    %c2_i32_69 = arith.constant 2 : i32
    %108 = arith.addi %107, %c2_i32_69 : i32
    %c0_70 = arith.constant 0 : index
    %109 = arith.index_cast %108 : i32 to index
    %c0_71 = arith.constant 0 : index
    %c0_72 = arith.constant 0 : index
    %110 = vector.load %arg2[%c0_70, %109, %c0_71, %c0_72] : memref<1x18x8x18xbf16, #tpu.memory_space<vmem>>, vector<1x1x8x18xbf16>
    %111 = vector.shape_cast %110 : vector<1x1x8x18xbf16> to vector<8x18xbf16>
    %112 = vector.extract_strided_slice %111 {offsets = [0, 0], sizes = [8, 16], strides = [1, 1]} : vector<8x18xbf16> to vector<8x16xbf16>
    %113 = vector.extract_strided_slice %111 {offsets = [0, 1], sizes = [8, 16], strides = [1, 1]} : vector<8x18xbf16> to vector<8x16xbf16>
    %114 = vector.extract_strided_slice %111 {offsets = [0, 2], sizes = [8, 16], strides = [1, 1]} : vector<8x18xbf16> to vector<8x16xbf16>
    %115 = tpu.concatenate %96, %97, %98, %104, %105, %106, %112, %113, %114 in 0 : vector<8x16xbf16>, vector<8x16xbf16>, vector<8x16xbf16>, vector<8x16xbf16>, vector<8x16xbf16>, vector<8x16xbf16>, vector<8x16xbf16>, vector<8x16xbf16>, vector<8x16xbf16> -> vector<72x16xbf16>
    %c0_73 = arith.constant 0 : index
    %c0_74 = arith.constant 0 : index
    %116 = vector.load %arg3[%c0_73, %c0_74] : memref<8x72xbf16, #tpu.memory_space<vmem>>, vector<8x72xbf16>
    %cst_75 = arith.constant dense<0.000000e+00> : vector<8x16xf32>
    %117 = tpu.matmul %116, %115, %cst_75 {dimension_numbers = #tpu.dot_dimension_numbers<[1], [0], [0], [1], [0, 0, 1, 1], [], []>} : vector<8x72xbf16>, vector<72x16xbf16>, vector<8x16xf32> -> vector<8x16xf32>
    %c0_76 = arith.constant 0 : index
    %c0_77 = arith.constant 0 : index
    %c3 = arith.constant 3 : index
    %c0_78 = arith.constant 0 : index
    %118 = vector.load %arg4[%c0_76, %c0_77, %c3, %c0_78] : memref<1x8x16x16xf32, #tpu.memory_space<vmem>>, vector<1x8x1x16xf32>
    %119 = vector.shape_cast %118 : vector<1x8x1x16xf32> to vector<8x16xf32>
    %120 = vector.shape_cast %117 : vector<8x16xf32> to vector<1x8x1x16xf32>
    tpu.vector_store %arg4[%c0_76, %c0_77, %c3, %c0_78], %120 {strides = array<i32>} : memref<1x8x16x16xf32, #tpu.memory_space<vmem>>, vector<1x8x1x16xf32>,
    %c4_i32 = arith.constant 4 : i32
    %121 = arith.addi %0, %c4_i32 : i32
    %c0_i32_79 = arith.constant 0 : i32
    %122 = arith.addi %121, %c0_i32_79 : i32
    %c0_80 = arith.constant 0 : index
    %123 = arith.index_cast %122 : i32 to index
    %c0_81 = arith.constant 0 : index
    %c0_82 = arith.constant 0 : index
    %124 = vector.load %arg2[%c0_80, %123, %c0_81, %c0_82] : memref<1x18x8x18xbf16, #tpu.memory_space<vmem>>, vector<1x1x8x18xbf16>
    %125 = vector.shape_cast %124 : vector<1x1x8x18xbf16> to vector<8x18xbf16>
    %126 = vector.extract_strided_slice %125 {offsets = [0, 0], sizes = [8, 16], strides = [1, 1]} : vector<8x18xbf16> to vector<8x16xbf16>
    %127 = vector.extract_strided_slice %125 {offsets = [0, 1], sizes = [8, 16], strides = [1, 1]} : vector<8x18xbf16> to vector<8x16xbf16>
    %128 = vector.extract_strided_slice %125 {offsets = [0, 2], sizes = [8, 16], strides = [1, 1]} : vector<8x18xbf16> to vector<8x16xbf16>
    %c4_i32_83 = arith.constant 4 : i32
    %129 = arith.addi %0, %c4_i32_83 : i32
    %c1_i32_84 = arith.constant 1 : i32
    %130 = arith.addi %129, %c1_i32_84 : i32
    %c0_85 = arith.constant 0 : index
    %131 = arith.index_cast %130 : i32 to index
    %c0_86 = arith.constant 0 : index
    %c0_87 = arith.constant 0 : index
    %132 = vector.load %arg2[%c0_85, %131, %c0_86, %c0_87] : memref<1x18x8x18xbf16, #tpu.memory_space<vmem>>, vector<1x1x8x18xbf16>
    %133 = vector.shape_cast %132 : vector<1x1x8x18xbf16> to vector<8x18xbf16>
    %134 = vector.extract_strided_slice %133 {offsets = [0, 0], sizes = [8, 16], strides = [1, 1]} : vector<8x18xbf16> to vector<8x16xbf16>
    %135 = vector.extract_strided_slice %133 {offsets = [0, 1], sizes = [8, 16], strides = [1, 1]} : vector<8x18xbf16> to vector<8x16xbf16>
    %136 = vector.extract_strided_slice %133 {offsets = [0, 2], sizes = [8, 16], strides = [1, 1]} : vector<8x18xbf16> to vector<8x16xbf16>
    %c4_i32_88 = arith.constant 4 : i32
    %137 = arith.addi %0, %c4_i32_88 : i32
    %c2_i32_89 = arith.constant 2 : i32
    %138 = arith.addi %137, %c2_i32_89 : i32
    %c0_90 = arith.constant 0 : index
    %139 = arith.index_cast %138 : i32 to index
    %c0_91 = arith.constant 0 : index
    %c0_92 = arith.constant 0 : index
    %140 = vector.load %arg2[%c0_90, %139, %c0_91, %c0_92] : memref<1x18x8x18xbf16, #tpu.memory_space<vmem>>, vector<1x1x8x18xbf16>
    %141 = vector.shape_cast %140 : vector<1x1x8x18xbf16> to vector<8x18xbf16>
    %142 = vector.extract_strided_slice %141 {offsets = [0, 0], sizes = [8, 16], strides = [1, 1]} : vector<8x18xbf16> to vector<8x16xbf16>
    %143 = vector.extract_strided_slice %141 {offsets = [0, 1], sizes = [8, 16], strides = [1, 1]} : vector<8x18xbf16> to vector<8x16xbf16>
    %144 = vector.extract_strided_slice %141 {offsets = [0, 2], sizes = [8, 16], strides = [1, 1]} : vector<8x18xbf16> to vector<8x16xbf16>
    %145 = tpu.concatenate %126, %127, %128, %134, %135, %136, %142, %143, %144 in 0 : vector<8x16xbf16>, vector<8x16xbf16>, vector<8x16xbf16>, vector<8x16xbf16>, vector<8x16xbf16>, vector<8x16xbf16>, vector<8x16xbf16>, vector<8x16xbf16>, vector<8x16xbf16> -> vector<72x16xbf16>
    %c0_93 = arith.constant 0 : index
    %c0_94 = arith.constant 0 : index
    %146 = vector.load %arg3[%c0_93, %c0_94] : memref<8x72xbf16, #tpu.memory_space<vmem>>, vector<8x72xbf16>
    %cst_95 = arith.constant dense<0.000000e+00> : vector<8x16xf32>
    %147 = tpu.matmul %146, %145, %cst_95 {dimension_numbers = #tpu.dot_dimension_numbers<[1], [0], [0], [1], [0, 0, 1, 1], [], []>} : vector<8x72xbf16>, vector<72x16xbf16>, vector<8x16xf32> -> vector<8x16xf32>
    %c0_96 = arith.constant 0 : index
    %c0_97 = arith.constant 0 : index
    %c4 = arith.constant 4 : index
    %c0_98 = arith.constant 0 : index
    %148 = vector.load %arg4[%c0_96, %c0_97, %c4, %c0_98] : memref<1x8x16x16xf32, #tpu.memory_space<vmem>>, vector<1x8x1x16xf32>
    %149 = vector.shape_cast %148 : vector<1x8x1x16xf32> to vector<8x16xf32>
    %150 = vector.shape_cast %147 : vector<8x16xf32> to vector<1x8x1x16xf32>
    tpu.vector_store %arg4[%c0_96, %c0_97, %c4, %c0_98], %150 {strides = array<i32>} : memref<1x8x16x16xf32, #tpu.memory_space<vmem>>, vector<1x8x1x16xf32>,
    %c5_i32 = arith.constant 5 : i32
    %151 = arith.addi %0, %c5_i32 : i32
    %c0_i32_99 = arith.constant 0 : i32
    %152 = arith.addi %151, %c0_i32_99 : i32
    %c0_100 = arith.constant 0 : index
    %153 = arith.index_cast %152 : i32 to index
    %c0_101 = arith.constant 0 : index
    %c0_102 = arith.constant 0 : index
    %154 = vector.load %arg2[%c0_100, %153, %c0_101, %c0_102] : memref<1x18x8x18xbf16, #tpu.memory_space<vmem>>, vector<1x1x8x18xbf16>
    %155 = vector.shape_cast %154 : vector<1x1x8x18xbf16> to vector<8x18xbf16>
    %156 = vector.extract_strided_slice %155 {offsets = [0, 0], sizes = [8, 16], strides = [1, 1]} : vector<8x18xbf16> to vector<8x16xbf16>
    %157 = vector.extract_strided_slice %155 {offsets = [0, 1], sizes = [8, 16], strides = [1, 1]} : vector<8x18xbf16> to vector<8x16xbf16>
    %158 = vector.extract_strided_slice %155 {offsets = [0, 2], sizes = [8, 16], strides = [1, 1]} : vector<8x18xbf16> to vector<8x16xbf16>
    %c5_i32_103 = arith.constant 5 : i32
    %159 = arith.addi %0, %c5_i32_103 : i32
    %c1_i32_104 = arith.constant 1 : i32
    %160 = arith.addi %159, %c1_i32_104 : i32
    %c0_105 = arith.constant 0 : index
    %161 = arith.index_cast %160 : i32 to index
    %c0_106 = arith.constant 0 : index
    %c0_107 = arith.constant 0 : index
    %162 = vector.load %arg2[%c0_105, %161, %c0_106, %c0_107] : memref<1x18x8x18xbf16, #tpu.memory_space<vmem>>, vector<1x1x8x18xbf16>
    %163 = vector.shape_cast %162 : vector<1x1x8x18xbf16> to vector<8x18xbf16>
    %164 = vector.extract_strided_slice %163 {offsets = [0, 0], sizes = [8, 16], strides = [1, 1]} : vector<8x18xbf16> to vector<8x16xbf16>
    %165 = vector.extract_strided_slice %163 {offsets = [0, 1], sizes = [8, 16], strides = [1, 1]} : vector<8x18xbf16> to vector<8x16xbf16>
    %166 = vector.extract_strided_slice %163 {offsets = [0, 2], sizes = [8, 16], strides = [1, 1]} : vector<8x18xbf16> to vector<8x16xbf16>
    %c5_i32_108 = arith.constant 5 : i32
    %167 = arith.addi %0, %c5_i32_108 : i32
    %c2_i32_109 = arith.constant 2 : i32
    %168 = arith.addi %167, %c2_i32_109 : i32
    %c0_110 = arith.constant 0 : index
    %169 = arith.index_cast %168 : i32 to index
    %c0_111 = arith.constant 0 : index
    %c0_112 = arith.constant 0 : index
    %170 = vector.load %arg2[%c0_110, %169, %c0_111, %c0_112] : memref<1x18x8x18xbf16, #tpu.memory_space<vmem>>, vector<1x1x8x18xbf16>
    %171 = vector.shape_cast %170 : vector<1x1x8x18xbf16> to vector<8x18xbf16>
    %172 = vector.extract_strided_slice %171 {offsets = [0, 0], sizes = [8, 16], strides = [1, 1]} : vector<8x18xbf16> to vector<8x16xbf16>
    %173 = vector.extract_strided_slice %171 {offsets = [0, 1], sizes = [8, 16], strides = [1, 1]} : vector<8x18xbf16> to vector<8x16xbf16>
    %174 = vector.extract_strided_slice %171 {offsets = [0, 2], sizes = [8, 16], strides = [1, 1]} : vector<8x18xbf16> to vector<8x16xbf16>
    %175 = tpu.concatenate %156, %157, %158, %164, %165, %166, %172, %173, %174 in 0 : vector<8x16xbf16>, vector<8x16xbf16>, vector<8x16xbf16>, vector<8x16xbf16>, vector<8x16xbf16>, vector<8x16xbf16>, vector<8x16xbf16>, vector<8x16xbf16>, vector<8x16xbf16> -> vector<72x16xbf16>
    %c0_113 = arith.constant 0 : index
    %c0_114 = arith.constant 0 : index
    %176 = vector.load %arg3[%c0_113, %c0_114] : memref<8x72xbf16, #tpu.memory_space<vmem>>, vector<8x72xbf16>
    %cst_115 = arith.constant dense<0.000000e+00> : vector<8x16xf32>
    %177 = tpu.matmul %176, %175, %cst_115 {dimension_numbers = #tpu.dot_dimension_numbers<[1], [0], [0], [1], [0, 0, 1, 1], [], []>} : vector<8x72xbf16>, vector<72x16xbf16>, vector<8x16xf32> -> vector<8x16xf32>
    %c0_116 = arith.constant 0 : index
    %c0_117 = arith.constant 0 : index
    %c5 = arith.constant 5 : index
    %c0_118 = arith.constant 0 : index
    %178 = vector.load %arg4[%c0_116, %c0_117, %c5, %c0_118] : memref<1x8x16x16xf32, #tpu.memory_space<vmem>>, vector<1x8x1x16xf32>
    %179 = vector.shape_cast %178 : vector<1x8x1x16xf32> to vector<8x16xf32>
    %180 = vector.shape_cast %177 : vector<8x16xf32> to vector<1x8x1x16xf32>
    tpu.vector_store %arg4[%c0_116, %c0_117, %c5, %c0_118], %180 {strides = array<i32>} : memref<1x8x16x16xf32, #tpu.memory_space<vmem>>, vector<1x8x1x16xf32>,
    %c6_i32 = arith.constant 6 : i32
    %181 = arith.addi %0, %c6_i32 : i32
    %c0_i32_119 = arith.constant 0 : i32
    %182 = arith.addi %181, %c0_i32_119 : i32
    %c0_120 = arith.constant 0 : index
    %183 = arith.index_cast %182 : i32 to index
    %c0_121 = arith.constant 0 : index
    %c0_122 = arith.constant 0 : index
    %184 = vector.load %arg2[%c0_120, %183, %c0_121, %c0_122] : memref<1x18x8x18xbf16, #tpu.memory_space<vmem>>, vector<1x1x8x18xbf16>
    %185 = vector.shape_cast %184 : vector<1x1x8x18xbf16> to vector<8x18xbf16>
    %186 = vector.extract_strided_slice %185 {offsets = [0, 0], sizes = [8, 16], strides = [1, 1]} : vector<8x18xbf16> to vector<8x16xbf16>
    %187 = vector.extract_strided_slice %185 {offsets = [0, 1], sizes = [8, 16], strides = [1, 1]} : vector<8x18xbf16> to vector<8x16xbf16>
    %188 = vector.extract_strided_slice %185 {offsets = [0, 2], sizes = [8, 16], strides = [1, 1]} : vector<8x18xbf16> to vector<8x16xbf16>
    %c6_i32_123 = arith.constant 6 : i32
    %189 = arith.addi %0, %c6_i32_123 : i32
    %c1_i32_124 = arith.constant 1 : i32
    %190 = arith.addi %189, %c1_i32_124 : i32
    %c0_125 = arith.constant 0 : index
    %191 = arith.index_cast %190 : i32 to index
    %c0_126 = arith.constant 0 : index
    %c0_127 = arith.constant 0 : index
    %192 = vector.load %arg2[%c0_125, %191, %c0_126, %c0_127] : memref<1x18x8x18xbf16, #tpu.memory_space<vmem>>, vector<1x1x8x18xbf16>
    %193 = vector.shape_cast %192 : vector<1x1x8x18xbf16> to vector<8x18xbf16>
    %194 = vector.extract_strided_slice %193 {offsets = [0, 0], sizes = [8, 16], strides = [1, 1]} : vector<8x18xbf16> to vector<8x16xbf16>
    %195 = vector.extract_strided_slice %193 {offsets = [0, 1], sizes = [8, 16], strides = [1, 1]} : vector<8x18xbf16> to vector<8x16xbf16>
    %196 = vector.extract_strided_slice %193 {offsets = [0, 2], sizes = [8, 16], strides = [1, 1]} : vector<8x18xbf16> to vector<8x16xbf16>
    %c6_i32_128 = arith.constant 6 : i32
    %197 = arith.addi %0, %c6_i32_128 : i32
    %c2_i32_129 = arith.constant 2 : i32
    %198 = arith.addi %197, %c2_i32_129 : i32
    %c0_130 = arith.constant 0 : index
    %199 = arith.index_cast %198 : i32 to index
    %c0_131 = arith.constant 0 : index
    %c0_132 = arith.constant 0 : index
    %200 = vector.load %arg2[%c0_130, %199, %c0_131, %c0_132] : memref<1x18x8x18xbf16, #tpu.memory_space<vmem>>, vector<1x1x8x18xbf16>
    %201 = vector.shape_cast %200 : vector<1x1x8x18xbf16> to vector<8x18xbf16>
    %202 = vector.extract_strided_slice %201 {offsets = [0, 0], sizes = [8, 16], strides = [1, 1]} : vector<8x18xbf16> to vector<8x16xbf16>
    %203 = vector.extract_strided_slice %201 {offsets = [0, 1], sizes = [8, 16], strides = [1, 1]} : vector<8x18xbf16> to vector<8x16xbf16>
    %204 = vector.extract_strided_slice %201 {offsets = [0, 2], sizes = [8, 16], strides = [1, 1]} : vector<8x18xbf16> to vector<8x16xbf16>
    %205 = tpu.concatenate %186, %187, %188, %194, %195, %196, %202, %203, %204 in 0 : vector<8x16xbf16>, vector<8x16xbf16>, vector<8x16xbf16>, vector<8x16xbf16>, vector<8x16xbf16>, vector<8x16xbf16>, vector<8x16xbf16>, vector<8x16xbf16>, vector<8x16xbf16> -> vector<72x16xbf16>
    %c0_133 = arith.constant 0 : index
    %c0_134 = arith.constant 0 : index
    %206 = vector.load %arg3[%c0_133, %c0_134] : memref<8x72xbf16, #tpu.memory_space<vmem>>, vector<8x72xbf16>
    %cst_135 = arith.constant dense<0.000000e+00> : vector<8x16xf32>
    %207 = tpu.matmul %206, %205, %cst_135 {dimension_numbers = #tpu.dot_dimension_numbers<[1], [0], [0], [1], [0, 0, 1, 1], [], []>} : vector<8x72xbf16>, vector<72x16xbf16>, vector<8x16xf32> -> vector<8x16xf32>
    %c0_136 = arith.constant 0 : index
    %c0_137 = arith.constant 0 : index
    %c6 = arith.constant 6 : index
    %c0_138 = arith.constant 0 : index
    %208 = vector.load %arg4[%c0_136, %c0_137, %c6, %c0_138] : memref<1x8x16x16xf32, #tpu.memory_space<vmem>>, vector<1x8x1x16xf32>
    %209 = vector.shape_cast %208 : vector<1x8x1x16xf32> to vector<8x16xf32>
    %210 = vector.shape_cast %207 : vector<8x16xf32> to vector<1x8x1x16xf32>
    tpu.vector_store %arg4[%c0_136, %c0_137, %c6, %c0_138], %210 {strides = array<i32>} : memref<1x8x16x16xf32, #tpu.memory_space<vmem>>, vector<1x8x1x16xf32>,
    %c7_i32 = arith.constant 7 : i32
    %211 = arith.addi %0, %c7_i32 : i32
    %c0_i32_139 = arith.constant 0 : i32
    %212 = arith.addi %211, %c0_i32_139 : i32
    %c0_140 = arith.constant 0 : index
    %213 = arith.index_cast %212 : i32 to index
    %c0_141 = arith.constant 0 : index
    %c0_142 = arith.constant 0 : index
    %214 = vector.load %arg2[%c0_140, %213, %c0_141, %c0_142] : memref<1x18x8x18xbf16, #tpu.memory_space<vmem>>, vector<1x1x8x18xbf16>
    %215 = vector.shape_cast %214 : vector<1x1x8x18xbf16> to vector<8x18xbf16>
    %216 = vector.extract_strided_slice %215 {offsets = [0, 0], sizes = [8, 16], strides = [1, 1]} : vector<8x18xbf16> to vector<8x16xbf16>
    %217 = vector.extract_strided_slice %215 {offsets = [0, 1], sizes = [8, 16], strides = [1, 1]} : vector<8x18xbf16> to vector<8x16xbf16>
    %218 = vector.extract_strided_slice %215 {offsets = [0, 2], sizes = [8, 16], strides = [1, 1]} : vector<8x18xbf16> to vector<8x16xbf16>
    %c7_i32_143 = arith.constant 7 : i32
    %219 = arith.addi %0, %c7_i32_143 : i32
    %c1_i32_144 = arith.constant 1 : i32
    %220 = arith.addi %219, %c1_i32_144 : i32
    %c0_145 = arith.constant 0 : index
    %221 = arith.index_cast %220 : i32 to index
    %c0_146 = arith.constant 0 : index
    %c0_147 = arith.constant 0 : index
    %222 = vector.load %arg2[%c0_145, %221, %c0_146, %c0_147] : memref<1x18x8x18xbf16, #tpu.memory_space<vmem>>, vector<1x1x8x18xbf16>
    %223 = vector.shape_cast %222 : vector<1x1x8x18xbf16> to vector<8x18xbf16>
    %224 = vector.extract_strided_slice %223 {offsets = [0, 0], sizes = [8, 16], strides = [1, 1]} : vector<8x18xbf16> to vector<8x16xbf16>
    %225 = vector.extract_strided_slice %223 {offsets = [0, 1], sizes = [8, 16], strides = [1, 1]} : vector<8x18xbf16> to vector<8x16xbf16>
    %226 = vector.extract_strided_slice %223 {offsets = [0, 2], sizes = [8, 16], strides = [1, 1]} : vector<8x18xbf16> to vector<8x16xbf16>
    %c7_i32_148 = arith.constant 7 : i32
    %227 = arith.addi %0, %c7_i32_148 : i32
    %c2_i32_149 = arith.constant 2 : i32
    %228 = arith.addi %227, %c2_i32_149 : i32
    %c0_150 = arith.constant 0 : index
    %229 = arith.index_cast %228 : i32 to index
    %c0_151 = arith.constant 0 : index
    %c0_152 = arith.constant 0 : index
    %230 = vector.load %arg2[%c0_150, %229, %c0_151, %c0_152] : memref<1x18x8x18xbf16, #tpu.memory_space<vmem>>, vector<1x1x8x18xbf16>
    %231 = vector.shape_cast %230 : vector<1x1x8x18xbf16> to vector<8x18xbf16>
    %232 = vector.extract_strided_slice %231 {offsets = [0, 0], sizes = [8, 16], strides = [1, 1]} : vector<8x18xbf16> to vector<8x16xbf16>
    %233 = vector.extract_strided_slice %231 {offsets = [0, 1], sizes = [8, 16], strides = [1, 1]} : vector<8x18xbf16> to vector<8x16xbf16>
    %234 = vector.extract_strided_slice %231 {offsets = [0, 2], sizes = [8, 16], strides = [1, 1]} : vector<8x18xbf16> to vector<8x16xbf16>
    %235 = tpu.concatenate %216, %217, %218, %224, %225, %226, %232, %233, %234 in 0 : vector<8x16xbf16>, vector<8x16xbf16>, vector<8x16xbf16>, vector<8x16xbf16>, vector<8x16xbf16>, vector<8x16xbf16>, vector<8x16xbf16>, vector<8x16xbf16>, vector<8x16xbf16> -> vector<72x16xbf16>
    %c0_153 = arith.constant 0 : index
    %c0_154 = arith.constant 0 : index
    %236 = vector.load %arg3[%c0_153, %c0_154] : memref<8x72xbf16, #tpu.memory_space<vmem>>, vector<8x72xbf16>
    %cst_155 = arith.constant dense<0.000000e+00> : vector<8x16xf32>
    %237 = tpu.matmul %236, %235, %cst_155 {dimension_numbers = #tpu.dot_dimension_numbers<[1], [0], [0], [1], [0, 0, 1, 1], [], []>} : vector<8x72xbf16>, vector<72x16xbf16>, vector<8x16xf32> -> vector<8x16xf32>
    %c0_156 = arith.constant 0 : index
    %c0_157 = arith.constant 0 : index
    %c7 = arith.constant 7 : index
    %c0_158 = arith.constant 0 : index
    %238 = vector.load %arg4[%c0_156, %c0_157, %c7, %c0_158] : memref<1x8x16x16xf32, #tpu.memory_space<vmem>>, vector<1x8x1x16xf32>
    %239 = vector.shape_cast %238 : vector<1x8x1x16xf32> to vector<8x16xf32>
    %240 = vector.shape_cast %237 : vector<8x16xf32> to vector<1x8x1x16xf32>
    tpu.vector_store %arg4[%c0_156, %c0_157, %c7, %c0_158], %240 {strides = array<i32>} : memref<1x8x16x16xf32, #tpu.memory_space<vmem>>, vector<1x8x1x16xf32>,
    %c8_i32 = arith.constant 8 : i32
    %241 = arith.addi %0, %c8_i32 : i32
    %c0_i32_159 = arith.constant 0 : i32
    %242 = arith.addi %241, %c0_i32_159 : i32
    %c0_160 = arith.constant 0 : index
    %243 = arith.index_cast %242 : i32 to index
    %c0_161 = arith.constant 0 : index
    %c0_162 = arith.constant 0 : index
    %244 = vector.load %arg2[%c0_160, %243, %c0_161, %c0_162] : memref<1x18x8x18xbf16, #tpu.memory_space<vmem>>, vector<1x1x8x18xbf16>
    %245 = vector.shape_cast %244 : vector<1x1x8x18xbf16> to vector<8x18xbf16>
    %246 = vector.extract_strided_slice %245 {offsets = [0, 0], sizes = [8, 16], strides = [1, 1]} : vector<8x18xbf16> to vector<8x16xbf16>
    %247 = vector.extract_strided_slice %245 {offsets = [0, 1], sizes = [8, 16], strides = [1, 1]} : vector<8x18xbf16> to vector<8x16xbf16>
    %248 = vector.extract_strided_slice %245 {offsets = [0, 2], sizes = [8, 16], strides = [1, 1]} : vector<8x18xbf16> to vector<8x16xbf16>
    %c8_i32_163 = arith.constant 8 : i32
    %249 = arith.addi %0, %c8_i32_163 : i32
    %c1_i32_164 = arith.constant 1 : i32
    %250 = arith.addi %249, %c1_i32_164 : i32
    %c0_165 = arith.constant 0 : index
    %251 = arith.index_cast %250 : i32 to index
    %c0_166 = arith.constant 0 : index
    %c0_167 = arith.constant 0 : index
    %252 = vector.load %arg2[%c0_165, %251, %c0_166, %c0_167] : memref<1x18x8x18xbf16, #tpu.memory_space<vmem>>, vector<1x1x8x18xbf16>
    %253 = vector.shape_cast %252 : vector<1x1x8x18xbf16> to vector<8x18xbf16>
    %254 = vector.extract_strided_slice %253 {offsets = [0, 0], sizes = [8, 16], strides = [1, 1]} : vector<8x18xbf16> to vector<8x16xbf16>
    %255 = vector.extract_strided_slice %253 {offsets = [0, 1], sizes = [8, 16], strides = [1, 1]} : vector<8x18xbf16> to vector<8x16xbf16>
    %256 = vector.extract_strided_slice %253 {offsets = [0, 2], sizes = [8, 16], strides = [1, 1]} : vector<8x18xbf16> to vector<8x16xbf16>
    %c8_i32_168 = arith.constant 8 : i32
    %257 = arith.addi %0, %c8_i32_168 : i32
    %c2_i32_169 = arith.constant 2 : i32
    %258 = arith.addi %257, %c2_i32_169 : i32
    %c0_170 = arith.constant 0 : index
    %259 = arith.index_cast %258 : i32 to index
    %c0_171 = arith.constant 0 : index
    %c0_172 = arith.constant 0 : index
    %260 = vector.load %arg2[%c0_170, %259, %c0_171, %c0_172] : memref<1x18x8x18xbf16, #tpu.memory_space<vmem>>, vector<1x1x8x18xbf16>
    %261 = vector.shape_cast %260 : vector<1x1x8x18xbf16> to vector<8x18xbf16>
    %262 = vector.extract_strided_slice %261 {offsets = [0, 0], sizes = [8, 16], strides = [1, 1]} : vector<8x18xbf16> to vector<8x16xbf16>
    %263 = vector.extract_strided_slice %261 {offsets = [0, 1], sizes = [8, 16], strides = [1, 1]} : vector<8x18xbf16> to vector<8x16xbf16>
    %264 = vector.extract_strided_slice %261 {offsets = [0, 2], sizes = [8, 16], strides = [1, 1]} : vector<8x18xbf16> to vector<8x16xbf16>
    %265 = tpu.concatenate %246, %247, %248, %254, %255, %256, %262, %263, %264 in 0 : vector<8x16xbf16>, vector<8x16xbf16>, vector<8x16xbf16>, vector<8x16xbf16>, vector<8x16xbf16>, vector<8x16xbf16>, vector<8x16xbf16>, vector<8x16xbf16>, vector<8x16xbf16> -> vector<72x16xbf16>
    %c0_173 = arith.constant 0 : index
    %c0_174 = arith.constant 0 : index
    %266 = vector.load %arg3[%c0_173, %c0_174] : memref<8x72xbf16, #tpu.memory_space<vmem>>, vector<8x72xbf16>
    %cst_175 = arith.constant dense<0.000000e+00> : vector<8x16xf32>
    %267 = tpu.matmul %266, %265, %cst_175 {dimension_numbers = #tpu.dot_dimension_numbers<[1], [0], [0], [1], [0, 0, 1, 1], [], []>} : vector<8x72xbf16>, vector<72x16xbf16>, vector<8x16xf32> -> vector<8x16xf32>
    %c0_176 = arith.constant 0 : index
    %c0_177 = arith.constant 0 : index
    %c8 = arith.constant 8 : index
    %c0_178 = arith.constant 0 : index
    %268 = vector.load %arg4[%c0_176, %c0_177, %c8, %c0_178] : memref<1x8x16x16xf32, #tpu.memory_space<vmem>>, vector<1x8x1x16xf32>
    %269 = vector.shape_cast %268 : vector<1x8x1x16xf32> to vector<8x16xf32>
    %270 = vector.shape_cast %267 : vector<8x16xf32> to vector<1x8x1x16xf32>
    tpu.vector_store %arg4[%c0_176, %c0_177, %c8, %c0_178], %270 {strides = array<i32>} : memref<1x8x16x16xf32, #tpu.memory_space<vmem>>, vector<1x8x1x16xf32>,
    %c9_i32 = arith.constant 9 : i32
    %271 = arith.addi %0, %c9_i32 : i32
    %c0_i32_179 = arith.constant 0 : i32
    %272 = arith.addi %271, %c0_i32_179 : i32
    %c0_180 = arith.constant 0 : index
    %273 = arith.index_cast %272 : i32 to index
    %c0_181 = arith.constant 0 : index
    %c0_182 = arith.constant 0 : index
    %274 = vector.load %arg2[%c0_180, %273, %c0_181, %c0_182] : memref<1x18x8x18xbf16, #tpu.memory_space<vmem>>, vector<1x1x8x18xbf16>
    %275 = vector.shape_cast %274 : vector<1x1x8x18xbf16> to vector<8x18xbf16>
    %276 = vector.extract_strided_slice %275 {offsets = [0, 0], sizes = [8, 16], strides = [1, 1]} : vector<8x18xbf16> to vector<8x16xbf16>
    %277 = vector.extract_strided_slice %275 {offsets = [0, 1], sizes = [8, 16], strides = [1, 1]} : vector<8x18xbf16> to vector<8x16xbf16>
    %278 = vector.extract_strided_slice %275 {offsets = [0, 2], sizes = [8, 16], strides = [1, 1]} : vector<8x18xbf16> to vector<8x16xbf16>
    %c9_i32_183 = arith.constant 9 : i32
    %279 = arith.addi %0, %c9_i32_183 : i32
    %c1_i32_184 = arith.constant 1 : i32
    %280 = arith.addi %279, %c1_i32_184 : i32
    %c0_185 = arith.constant 0 : index
    %281 = arith.index_cast %280 : i32 to index
    %c0_186 = arith.constant 0 : index
    %c0_187 = arith.constant 0 : index
    %282 = vector.load %arg2[%c0_185, %281, %c0_186, %c0_187] : memref<1x18x8x18xbf16, #tpu.memory_space<vmem>>, vector<1x1x8x18xbf16>
    %283 = vector.shape_cast %282 : vector<1x1x8x18xbf16> to vector<8x18xbf16>
    %284 = vector.extract_strided_slice %283 {offsets = [0, 0], sizes = [8, 16], strides = [1, 1]} : vector<8x18xbf16> to vector<8x16xbf16>
    %285 = vector.extract_strided_slice %283 {offsets = [0, 1], sizes = [8, 16], strides = [1, 1]} : vector<8x18xbf16> to vector<8x16xbf16>
    %286 = vector.extract_strided_slice %283 {offsets = [0, 2], sizes = [8, 16], strides = [1, 1]} : vector<8x18xbf16> to vector<8x16xbf16>
    %c9_i32_188 = arith.constant 9 : i32
    %287 = arith.addi %0, %c9_i32_188 : i32
    %c2_i32_189 = arith.constant 2 : i32
    %288 = arith.addi %287, %c2_i32_189 : i32
    %c0_190 = arith.constant 0 : index
    %289 = arith.index_cast %288 : i32 to index
    %c0_191 = arith.constant 0 : index
    %c0_192 = arith.constant 0 : index
    %290 = vector.load %arg2[%c0_190, %289, %c0_191, %c0_192] : memref<1x18x8x18xbf16, #tpu.memory_space<vmem>>, vector<1x1x8x18xbf16>
    %291 = vector.shape_cast %290 : vector<1x1x8x18xbf16> to vector<8x18xbf16>
    %292 = vector.extract_strided_slice %291 {offsets = [0, 0], sizes = [8, 16], strides = [1, 1]} : vector<8x18xbf16> to vector<8x16xbf16>
    %293 = vector.extract_strided_slice %291 {offsets = [0, 1], sizes = [8, 16], strides = [1, 1]} : vector<8x18xbf16> to vector<8x16xbf16>
    %294 = vector.extract_strided_slice %291 {offsets = [0, 2], sizes = [8, 16], strides = [1, 1]} : vector<8x18xbf16> to vector<8x16xbf16>
    %295 = tpu.concatenate %276, %277, %278, %284, %285, %286, %292, %293, %294 in 0 : vector<8x16xbf16>, vector<8x16xbf16>, vector<8x16xbf16>, vector<8x16xbf16>, vector<8x16xbf16>, vector<8x16xbf16>, vector<8x16xbf16>, vector<8x16xbf16>, vector<8x16xbf16> -> vector<72x16xbf16>
    %c0_193 = arith.constant 0 : index
    %c0_194 = arith.constant 0 : index
    %296 = vector.load %arg3[%c0_193, %c0_194] : memref<8x72xbf16, #tpu.memory_space<vmem>>, vector<8x72xbf16>
    %cst_195 = arith.constant dense<0.000000e+00> : vector<8x16xf32>
    %297 = tpu.matmul %296, %295, %cst_195 {dimension_numbers = #tpu.dot_dimension_numbers<[1], [0], [0], [1], [0, 0, 1, 1], [], []>} : vector<8x72xbf16>, vector<72x16xbf16>, vector<8x16xf32> -> vector<8x16xf32>
    %c0_196 = arith.constant 0 : index
    %c0_197 = arith.constant 0 : index
    %c9 = arith.constant 9 : index
    %c0_198 = arith.constant 0 : index
    %298 = vector.load %arg4[%c0_196, %c0_197, %c9, %c0_198] : memref<1x8x16x16xf32, #tpu.memory_space<vmem>>, vector<1x8x1x16xf32>
    %299 = vector.shape_cast %298 : vector<1x8x1x16xf32> to vector<8x16xf32>
    %300 = vector.shape_cast %297 : vector<8x16xf32> to vector<1x8x1x16xf32>
    tpu.vector_store %arg4[%c0_196, %c0_197, %c9, %c0_198], %300 {strides = array<i32>} : memref<1x8x16x16xf32, #tpu.memory_space<vmem>>, vector<1x8x1x16xf32>,
    %c10_i32 = arith.constant 10 : i32
    %301 = arith.addi %0, %c10_i32 : i32
    %c0_i32_199 = arith.constant 0 : i32
    %302 = arith.addi %301, %c0_i32_199 : i32
    %c0_200 = arith.constant 0 : index
    %303 = arith.index_cast %302 : i32 to index
    %c0_201 = arith.constant 0 : index
    %c0_202 = arith.constant 0 : index
    %304 = vector.load %arg2[%c0_200, %303, %c0_201, %c0_202] : memref<1x18x8x18xbf16, #tpu.memory_space<vmem>>, vector<1x1x8x18xbf16>
    %305 = vector.shape_cast %304 : vector<1x1x8x18xbf16> to vector<8x18xbf16>
    %306 = vector.extract_strided_slice %305 {offsets = [0, 0], sizes = [8, 16], strides = [1, 1]} : vector<8x18xbf16> to vector<8x16xbf16>
    %307 = vector.extract_strided_slice %305 {offsets = [0, 1], sizes = [8, 16], strides = [1, 1]} : vector<8x18xbf16> to vector<8x16xbf16>
    %308 = vector.extract_strided_slice %305 {offsets = [0, 2], sizes = [8, 16], strides = [1, 1]} : vector<8x18xbf16> to vector<8x16xbf16>
    %c10_i32_203 = arith.constant 10 : i32
    %309 = arith.addi %0, %c10_i32_203 : i32
    %c1_i32_204 = arith.constant 1 : i32
    %310 = arith.addi %309, %c1_i32_204 : i32
    %c0_205 = arith.constant 0 : index
    %311 = arith.index_cast %310 : i32 to index
    %c0_206 = arith.constant 0 : index
    %c0_207 = arith.constant 0 : index
    %312 = vector.load %arg2[%c0_205, %311, %c0_206, %c0_207] : memref<1x18x8x18xbf16, #tpu.memory_space<vmem>>, vector<1x1x8x18xbf16>
    %313 = vector.shape_cast %312 : vector<1x1x8x18xbf16> to vector<8x18xbf16>
    %314 = vector.extract_strided_slice %313 {offsets = [0, 0], sizes = [8, 16], strides = [1, 1]} : vector<8x18xbf16> to vector<8x16xbf16>
    %315 = vector.extract_strided_slice %313 {offsets = [0, 1], sizes = [8, 16], strides = [1, 1]} : vector<8x18xbf16> to vector<8x16xbf16>
    %316 = vector.extract_strided_slice %313 {offsets = [0, 2], sizes = [8, 16], strides = [1, 1]} : vector<8x18xbf16> to vector<8x16xbf16>
    %c10_i32_208 = arith.constant 10 : i32
    %317 = arith.addi %0, %c10_i32_208 : i32
    %c2_i32_209 = arith.constant 2 : i32
    %318 = arith.addi %317, %c2_i32_209 : i32
    %c0_210 = arith.constant 0 : index
    %319 = arith.index_cast %318 : i32 to index
    %c0_211 = arith.constant 0 : index
    %c0_212 = arith.constant 0 : index
    %320 = vector.load %arg2[%c0_210, %319, %c0_211, %c0_212] : memref<1x18x8x18xbf16, #tpu.memory_space<vmem>>, vector<1x1x8x18xbf16>
    %321 = vector.shape_cast %320 : vector<1x1x8x18xbf16> to vector<8x18xbf16>
    %322 = vector.extract_strided_slice %321 {offsets = [0, 0], sizes = [8, 16], strides = [1, 1]} : vector<8x18xbf16> to vector<8x16xbf16>
    %323 = vector.extract_strided_slice %321 {offsets = [0, 1], sizes = [8, 16], strides = [1, 1]} : vector<8x18xbf16> to vector<8x16xbf16>
    %324 = vector.extract_strided_slice %321 {offsets = [0, 2], sizes = [8, 16], strides = [1, 1]} : vector<8x18xbf16> to vector<8x16xbf16>
    %325 = tpu.concatenate %306, %307, %308, %314, %315, %316, %322, %323, %324 in 0 : vector<8x16xbf16>, vector<8x16xbf16>, vector<8x16xbf16>, vector<8x16xbf16>, vector<8x16xbf16>, vector<8x16xbf16>, vector<8x16xbf16>, vector<8x16xbf16>, vector<8x16xbf16> -> vector<72x16xbf16>
    %c0_213 = arith.constant 0 : index
    %c0_214 = arith.constant 0 : index
    %326 = vector.load %arg3[%c0_213, %c0_214] : memref<8x72xbf16, #tpu.memory_space<vmem>>, vector<8x72xbf16>
    %cst_215 = arith.constant dense<0.000000e+00> : vector<8x16xf32>
    %327 = tpu.matmul %326, %325, %cst_215 {dimension_numbers = #tpu.dot_dimension_numbers<[1], [0], [0], [1], [0, 0, 1, 1], [], []>} : vector<8x72xbf16>, vector<72x16xbf16>, vector<8x16xf32> -> vector<8x16xf32>
    %c0_216 = arith.constant 0 : index
    %c0_217 = arith.constant 0 : index
    %c10 = arith.constant 10 : index
    %c0_218 = arith.constant 0 : index
    %328 = vector.load %arg4[%c0_216, %c0_217, %c10, %c0_218] : memref<1x8x16x16xf32, #tpu.memory_space<vmem>>, vector<1x8x1x16xf32>
    %329 = vector.shape_cast %328 : vector<1x8x1x16xf32> to vector<8x16xf32>
    %330 = vector.shape_cast %327 : vector<8x16xf32> to vector<1x8x1x16xf32>
    tpu.vector_store %arg4[%c0_216, %c0_217, %c10, %c0_218], %330 {strides = array<i32>} : memref<1x8x16x16xf32, #tpu.memory_space<vmem>>, vector<1x8x1x16xf32>,
    %c11_i32 = arith.constant 11 : i32
    %331 = arith.addi %0, %c11_i32 : i32
    %c0_i32_219 = arith.constant 0 : i32
    %332 = arith.addi %331, %c0_i32_219 : i32
    %c0_220 = arith.constant 0 : index
    %333 = arith.index_cast %332 : i32 to index
    %c0_221 = arith.constant 0 : index
    %c0_222 = arith.constant 0 : index
    %334 = vector.load %arg2[%c0_220, %333, %c0_221, %c0_222] : memref<1x18x8x18xbf16, #tpu.memory_space<vmem>>, vector<1x1x8x18xbf16>
    %335 = vector.shape_cast %334 : vector<1x1x8x18xbf16> to vector<8x18xbf16>
    %336 = vector.extract_strided_slice %335 {offsets = [0, 0], sizes = [8, 16], strides = [1, 1]} : vector<8x18xbf16> to vector<8x16xbf16>
    %337 = vector.extract_strided_slice %335 {offsets = [0, 1], sizes = [8, 16], strides = [1, 1]} : vector<8x18xbf16> to vector<8x16xbf16>
    %338 = vector.extract_strided_slice %335 {offsets = [0, 2], sizes = [8, 16], strides = [1, 1]} : vector<8x18xbf16> to vector<8x16xbf16>
    %c11_i32_223 = arith.constant 11 : i32
    %339 = arith.addi %0, %c11_i32_223 : i32
    %c1_i32_224 = arith.constant 1 : i32
    %340 = arith.addi %339, %c1_i32_224 : i32
    %c0_225 = arith.constant 0 : index
    %341 = arith.index_cast %340 : i32 to index
    %c0_226 = arith.constant 0 : index
    %c0_227 = arith.constant 0 : index
    %342 = vector.load %arg2[%c0_225, %341, %c0_226, %c0_227] : memref<1x18x8x18xbf16, #tpu.memory_space<vmem>>, vector<1x1x8x18xbf16>
    %343 = vector.shape_cast %342 : vector<1x1x8x18xbf16> to vector<8x18xbf16>
    %344 = vector.extract_strided_slice %343 {offsets = [0, 0], sizes = [8, 16], strides = [1, 1]} : vector<8x18xbf16> to vector<8x16xbf16>
    %345 = vector.extract_strided_slice %343 {offsets = [0, 1], sizes = [8, 16], strides = [1, 1]} : vector<8x18xbf16> to vector<8x16xbf16>
    %346 = vector.extract_strided_slice %343 {offsets = [0, 2], sizes = [8, 16], strides = [1, 1]} : vector<8x18xbf16> to vector<8x16xbf16>
    %c11_i32_228 = arith.constant 11 : i32
    %347 = arith.addi %0, %c11_i32_228 : i32
    %c2_i32_229 = arith.constant 2 : i32
    %348 = arith.addi %347, %c2_i32_229 : i32
    %c0_230 = arith.constant 0 : index
    %349 = arith.index_cast %348 : i32 to index
    %c0_231 = arith.constant 0 : index
    %c0_232 = arith.constant 0 : index
    %350 = vector.load %arg2[%c0_230, %349, %c0_231, %c0_232] : memref<1x18x8x18xbf16, #tpu.memory_space<vmem>>, vector<1x1x8x18xbf16>
    %351 = vector.shape_cast %350 : vector<1x1x8x18xbf16> to vector<8x18xbf16>
    %352 = vector.extract_strided_slice %351 {offsets = [0, 0], sizes = [8, 16], strides = [1, 1]} : vector<8x18xbf16> to vector<8x16xbf16>
    %353 = vector.extract_strided_slice %351 {offsets = [0, 1], sizes = [8, 16], strides = [1, 1]} : vector<8x18xbf16> to vector<8x16xbf16>
    %354 = vector.extract_strided_slice %351 {offsets = [0, 2], sizes = [8, 16], strides = [1, 1]} : vector<8x18xbf16> to vector<8x16xbf16>
    %355 = tpu.concatenate %336, %337, %338, %344, %345, %346, %352, %353, %354 in 0 : vector<8x16xbf16>, vector<8x16xbf16>, vector<8x16xbf16>, vector<8x16xbf16>, vector<8x16xbf16>, vector<8x16xbf16>, vector<8x16xbf16>, vector<8x16xbf16>, vector<8x16xbf16> -> vector<72x16xbf16>
    %c0_233 = arith.constant 0 : index
    %c0_234 = arith.constant 0 : index
    %356 = vector.load %arg3[%c0_233, %c0_234] : memref<8x72xbf16, #tpu.memory_space<vmem>>, vector<8x72xbf16>
    %cst_235 = arith.constant dense<0.000000e+00> : vector<8x16xf32>
    %357 = tpu.matmul %356, %355, %cst_235 {dimension_numbers = #tpu.dot_dimension_numbers<[1], [0], [0], [1], [0, 0, 1, 1], [], []>} : vector<8x72xbf16>, vector<72x16xbf16>, vector<8x16xf32> -> vector<8x16xf32>
    %c0_236 = arith.constant 0 : index
    %c0_237 = arith.constant 0 : index
    %c11 = arith.constant 11 : index
    %c0_238 = arith.constant 0 : index
    %358 = vector.load %arg4[%c0_236, %c0_237, %c11, %c0_238] : memref<1x8x16x16xf32, #tpu.memory_space<vmem>>, vector<1x8x1x16xf32>
    %359 = vector.shape_cast %358 : vector<1x8x1x16xf32> to vector<8x16xf32>
    %360 = vector.shape_cast %357 : vector<8x16xf32> to vector<1x8x1x16xf32>
    tpu.vector_store %arg4[%c0_236, %c0_237, %c11, %c0_238], %360 {strides = array<i32>} : memref<1x8x16x16xf32, #tpu.memory_space<vmem>>, vector<1x8x1x16xf32>,
    %c12_i32 = arith.constant 12 : i32
    %361 = arith.addi %0, %c12_i32 : i32
    %c0_i32_239 = arith.constant 0 : i32
    %362 = arith.addi %361, %c0_i32_239 : i32
    %c0_240 = arith.constant 0 : index
    %363 = arith.index_cast %362 : i32 to index
    %c0_241 = arith.constant 0 : index
    %c0_242 = arith.constant 0 : index
    %364 = vector.load %arg2[%c0_240, %363, %c0_241, %c0_242] : memref<1x18x8x18xbf16, #tpu.memory_space<vmem>>, vector<1x1x8x18xbf16>
    %365 = vector.shape_cast %364 : vector<1x1x8x18xbf16> to vector<8x18xbf16>
    %366 = vector.extract_strided_slice %365 {offsets = [0, 0], sizes = [8, 16], strides = [1, 1]} : vector<8x18xbf16> to vector<8x16xbf16>
    %367 = vector.extract_strided_slice %365 {offsets = [0, 1], sizes = [8, 16], strides = [1, 1]} : vector<8x18xbf16> to vector<8x16xbf16>
    %368 = vector.extract_strided_slice %365 {offsets = [0, 2], sizes = [8, 16], strides = [1, 1]} : vector<8x18xbf16> to vector<8x16xbf16>
    %c12_i32_243 = arith.constant 12 : i32
    %369 = arith.addi %0, %c12_i32_243 : i32
    %c1_i32_244 = arith.constant 1 : i32
    %370 = arith.addi %369, %c1_i32_244 : i32
    %c0_245 = arith.constant 0 : index
    %371 = arith.index_cast %370 : i32 to index
    %c0_246 = arith.constant 0 : index
    %c0_247 = arith.constant 0 : index
    %372 = vector.load %arg2[%c0_245, %371, %c0_246, %c0_247] : memref<1x18x8x18xbf16, #tpu.memory_space<vmem>>, vector<1x1x8x18xbf16>
    %373 = vector.shape_cast %372 : vector<1x1x8x18xbf16> to vector<8x18xbf16>
    %374 = vector.extract_strided_slice %373 {offsets = [0, 0], sizes = [8, 16], strides = [1, 1]} : vector<8x18xbf16> to vector<8x16xbf16>
    %375 = vector.extract_strided_slice %373 {offsets = [0, 1], sizes = [8, 16], strides = [1, 1]} : vector<8x18xbf16> to vector<8x16xbf16>
    %376 = vector.extract_strided_slice %373 {offsets = [0, 2], sizes = [8, 16], strides = [1, 1]} : vector<8x18xbf16> to vector<8x16xbf16>
    %c12_i32_248 = arith.constant 12 : i32
    %377 = arith.addi %0, %c12_i32_248 : i32
    %c2_i32_249 = arith.constant 2 : i32
    %378 = arith.addi %377, %c2_i32_249 : i32
    %c0_250 = arith.constant 0 : index
    %379 = arith.index_cast %378 : i32 to index
    %c0_251 = arith.constant 0 : index
    %c0_252 = arith.constant 0 : index
    %380 = vector.load %arg2[%c0_250, %379, %c0_251, %c0_252] : memref<1x18x8x18xbf16, #tpu.memory_space<vmem>>, vector<1x1x8x18xbf16>
    %381 = vector.shape_cast %380 : vector<1x1x8x18xbf16> to vector<8x18xbf16>
    %382 = vector.extract_strided_slice %381 {offsets = [0, 0], sizes = [8, 16], strides = [1, 1]} : vector<8x18xbf16> to vector<8x16xbf16>
    %383 = vector.extract_strided_slice %381 {offsets = [0, 1], sizes = [8, 16], strides = [1, 1]} : vector<8x18xbf16> to vector<8x16xbf16>
    %384 = vector.extract_strided_slice %381 {offsets = [0, 2], sizes = [8, 16], strides = [1, 1]} : vector<8x18xbf16> to vector<8x16xbf16>
    %385 = tpu.concatenate %366, %367, %368, %374, %375, %376, %382, %383, %384 in 0 : vector<8x16xbf16>, vector<8x16xbf16>, vector<8x16xbf16>, vector<8x16xbf16>, vector<8x16xbf16>, vector<8x16xbf16>, vector<8x16xbf16>, vector<8x16xbf16>, vector<8x16xbf16> -> vector<72x16xbf16>
    %c0_253 = arith.constant 0 : index
    %c0_254 = arith.constant 0 : index
    %386 = vector.load %arg3[%c0_253, %c0_254] : memref<8x72xbf16, #tpu.memory_space<vmem>>, vector<8x72xbf16>
    %cst_255 = arith.constant dense<0.000000e+00> : vector<8x16xf32>
    %387 = tpu.matmul %386, %385, %cst_255 {dimension_numbers = #tpu.dot_dimension_numbers<[1], [0], [0], [1], [0, 0, 1, 1], [], []>} : vector<8x72xbf16>, vector<72x16xbf16>, vector<8x16xf32> -> vector<8x16xf32>
    %c0_256 = arith.constant 0 : index
    %c0_257 = arith.constant 0 : index
    %c12 = arith.constant 12 : index
    %c0_258 = arith.constant 0 : index
    %388 = vector.load %arg4[%c0_256, %c0_257, %c12, %c0_258] : memref<1x8x16x16xf32, #tpu.memory_space<vmem>>, vector<1x8x1x16xf32>
    %389 = vector.shape_cast %388 : vector<1x8x1x16xf32> to vector<8x16xf32>
    %390 = vector.shape_cast %387 : vector<8x16xf32> to vector<1x8x1x16xf32>
    tpu.vector_store %arg4[%c0_256, %c0_257, %c12, %c0_258], %390 {strides = array<i32>} : memref<1x8x16x16xf32, #tpu.memory_space<vmem>>, vector<1x8x1x16xf32>,
    %c13_i32 = arith.constant 13 : i32
    %391 = arith.addi %0, %c13_i32 : i32
    %c0_i32_259 = arith.constant 0 : i32
    %392 = arith.addi %391, %c0_i32_259 : i32
    %c0_260 = arith.constant 0 : index
    %393 = arith.index_cast %392 : i32 to index
    %c0_261 = arith.constant 0 : index
    %c0_262 = arith.constant 0 : index
    %394 = vector.load %arg2[%c0_260, %393, %c0_261, %c0_262] : memref<1x18x8x18xbf16, #tpu.memory_space<vmem>>, vector<1x1x8x18xbf16>
    %395 = vector.shape_cast %394 : vector<1x1x8x18xbf16> to vector<8x18xbf16>
    %396 = vector.extract_strided_slice %395 {offsets = [0, 0], sizes = [8, 16], strides = [1, 1]} : vector<8x18xbf16> to vector<8x16xbf16>
    %397 = vector.extract_strided_slice %395 {offsets = [0, 1], sizes = [8, 16], strides = [1, 1]} : vector<8x18xbf16> to vector<8x16xbf16>
    %398 = vector.extract_strided_slice %395 {offsets = [0, 2], sizes = [8, 16], strides = [1, 1]} : vector<8x18xbf16> to vector<8x16xbf16>
    %c13_i32_263 = arith.constant 13 : i32
    %399 = arith.addi %0, %c13_i32_263 : i32
    %c1_i32_264 = arith.constant 1 : i32
    %400 = arith.addi %399, %c1_i32_264 : i32
    %c0_265 = arith.constant 0 : index
    %401 = arith.index_cast %400 : i32 to index
    %c0_266 = arith.constant 0 : index
    %c0_267 = arith.constant 0 : index
    %402 = vector.load %arg2[%c0_265, %401, %c0_266, %c0_267] : memref<1x18x8x18xbf16, #tpu.memory_space<vmem>>, vector<1x1x8x18xbf16>
    %403 = vector.shape_cast %402 : vector<1x1x8x18xbf16> to vector<8x18xbf16>
    %404 = vector.extract_strided_slice %403 {offsets = [0, 0], sizes = [8, 16], strides = [1, 1]} : vector<8x18xbf16> to vector<8x16xbf16>
    %405 = vector.extract_strided_slice %403 {offsets = [0, 1], sizes = [8, 16], strides = [1, 1]} : vector<8x18xbf16> to vector<8x16xbf16>
    %406 = vector.extract_strided_slice %403 {offsets = [0, 2], sizes = [8, 16], strides = [1, 1]} : vector<8x18xbf16> to vector<8x16xbf16>
    %c13_i32_268 = arith.constant 13 : i32
    %407 = arith.addi %0, %c13_i32_268 : i32
    %c2_i32_269 = arith.constant 2 : i32
    %408 = arith.addi %407, %c2_i32_269 : i32
    %c0_270 = arith.constant 0 : index
    %409 = arith.index_cast %408 : i32 to index
    %c0_271 = arith.constant 0 : index
    %c0_272 = arith.constant 0 : index
    %410 = vector.load %arg2[%c0_270, %409, %c0_271, %c0_272] : memref<1x18x8x18xbf16, #tpu.memory_space<vmem>>, vector<1x1x8x18xbf16>
    %411 = vector.shape_cast %410 : vector<1x1x8x18xbf16> to vector<8x18xbf16>
    %412 = vector.extract_strided_slice %411 {offsets = [0, 0], sizes = [8, 16], strides = [1, 1]} : vector<8x18xbf16> to vector<8x16xbf16>
    %413 = vector.extract_strided_slice %411 {offsets = [0, 1], sizes = [8, 16], strides = [1, 1]} : vector<8x18xbf16> to vector<8x16xbf16>
    %414 = vector.extract_strided_slice %411 {offsets = [0, 2], sizes = [8, 16], strides = [1, 1]} : vector<8x18xbf16> to vector<8x16xbf16>
    %415 = tpu.concatenate %396, %397, %398, %404, %405, %406, %412, %413, %414 in 0 : vector<8x16xbf16>, vector<8x16xbf16>, vector<8x16xbf16>, vector<8x16xbf16>, vector<8x16xbf16>, vector<8x16xbf16>, vector<8x16xbf16>, vector<8x16xbf16>, vector<8x16xbf16> -> vector<72x16xbf16>
    %c0_273 = arith.constant 0 : index
    %c0_274 = arith.constant 0 : index
    %416 = vector.load %arg3[%c0_273, %c0_274] : memref<8x72xbf16, #tpu.memory_space<vmem>>, vector<8x72xbf16>
    %cst_275 = arith.constant dense<0.000000e+00> : vector<8x16xf32>
    %417 = tpu.matmul %416, %415, %cst_275 {dimension_numbers = #tpu.dot_dimension_numbers<[1], [0], [0], [1], [0, 0, 1, 1], [], []>} : vector<8x72xbf16>, vector<72x16xbf16>, vector<8x16xf32> -> vector<8x16xf32>
    %c0_276 = arith.constant 0 : index
    %c0_277 = arith.constant 0 : index
    %c13 = arith.constant 13 : index
    %c0_278 = arith.constant 0 : index
    %418 = vector.load %arg4[%c0_276, %c0_277, %c13, %c0_278] : memref<1x8x16x16xf32, #tpu.memory_space<vmem>>, vector<1x8x1x16xf32>
    %419 = vector.shape_cast %418 : vector<1x8x1x16xf32> to vector<8x16xf32>
    %420 = vector.shape_cast %417 : vector<8x16xf32> to vector<1x8x1x16xf32>
    tpu.vector_store %arg4[%c0_276, %c0_277, %c13, %c0_278], %420 {strides = array<i32>} : memref<1x8x16x16xf32, #tpu.memory_space<vmem>>, vector<1x8x1x16xf32>,
    %c14_i32 = arith.constant 14 : i32
    %421 = arith.addi %0, %c14_i32 : i32
    %c0_i32_279 = arith.constant 0 : i32
    %422 = arith.addi %421, %c0_i32_279 : i32
    %c0_280 = arith.constant 0 : index
    %423 = arith.index_cast %422 : i32 to index
    %c0_281 = arith.constant 0 : index
    %c0_282 = arith.constant 0 : index
    %424 = vector.load %arg2[%c0_280, %423, %c0_281, %c0_282] : memref<1x18x8x18xbf16, #tpu.memory_space<vmem>>, vector<1x1x8x18xbf16>
    %425 = vector.shape_cast %424 : vector<1x1x8x18xbf16> to vector<8x18xbf16>
    %426 = vector.extract_strided_slice %425 {offsets = [0, 0], sizes = [8, 16], strides = [1, 1]} : vector<8x18xbf16> to vector<8x16xbf16>
    %427 = vector.extract_strided_slice %425 {offsets = [0, 1], sizes = [8, 16], strides = [1, 1]} : vector<8x18xbf16> to vector<8x16xbf16>
    %428 = vector.extract_strided_slice %425 {offsets = [0, 2], sizes = [8, 16], strides = [1, 1]} : vector<8x18xbf16> to vector<8x16xbf16>
    %c14_i32_283 = arith.constant 14 : i32
    %429 = arith.addi %0, %c14_i32_283 : i32
    %c1_i32_284 = arith.constant 1 : i32
    %430 = arith.addi %429, %c1_i32_284 : i32
    %c0_285 = arith.constant 0 : index
    %431 = arith.index_cast %430 : i32 to index
    %c0_286 = arith.constant 0 : index
    %c0_287 = arith.constant 0 : index
    %432 = vector.load %arg2[%c0_285, %431, %c0_286, %c0_287] : memref<1x18x8x18xbf16, #tpu.memory_space<vmem>>, vector<1x1x8x18xbf16>
    %433 = vector.shape_cast %432 : vector<1x1x8x18xbf16> to vector<8x18xbf16>
    %434 = vector.extract_strided_slice %433 {offsets = [0, 0], sizes = [8, 16], strides = [1, 1]} : vector<8x18xbf16> to vector<8x16xbf16>
    %435 = vector.extract_strided_slice %433 {offsets = [0, 1], sizes = [8, 16], strides = [1, 1]} : vector<8x18xbf16> to vector<8x16xbf16>
    %436 = vector.extract_strided_slice %433 {offsets = [0, 2], sizes = [8, 16], strides = [1, 1]} : vector<8x18xbf16> to vector<8x16xbf16>
    %c14_i32_288 = arith.constant 14 : i32
    %437 = arith.addi %0, %c14_i32_288 : i32
    %c2_i32_289 = arith.constant 2 : i32
    %438 = arith.addi %437, %c2_i32_289 : i32
    %c0_290 = arith.constant 0 : index
    %439 = arith.index_cast %438 : i32 to index
    %c0_291 = arith.constant 0 : index
    %c0_292 = arith.constant 0 : index
    %440 = vector.load %arg2[%c0_290, %439, %c0_291, %c0_292] : memref<1x18x8x18xbf16, #tpu.memory_space<vmem>>, vector<1x1x8x18xbf16>
    %441 = vector.shape_cast %440 : vector<1x1x8x18xbf16> to vector<8x18xbf16>
    %442 = vector.extract_strided_slice %441 {offsets = [0, 0], sizes = [8, 16], strides = [1, 1]} : vector<8x18xbf16> to vector<8x16xbf16>
    %443 = vector.extract_strided_slice %441 {offsets = [0, 1], sizes = [8, 16], strides = [1, 1]} : vector<8x18xbf16> to vector<8x16xbf16>
    %444 = vector.extract_strided_slice %441 {offsets = [0, 2], sizes = [8, 16], strides = [1, 1]} : vector<8x18xbf16> to vector<8x16xbf16>
    %445 = tpu.concatenate %426, %427, %428, %434, %435, %436, %442, %443, %444 in 0 : vector<8x16xbf16>, vector<8x16xbf16>, vector<8x16xbf16>, vector<8x16xbf16>, vector<8x16xbf16>, vector<8x16xbf16>, vector<8x16xbf16>, vector<8x16xbf16>, vector<8x16xbf16> -> vector<72x16xbf16>
    %c0_293 = arith.constant 0 : index
    %c0_294 = arith.constant 0 : index
    %446 = vector.load %arg3[%c0_293, %c0_294] : memref<8x72xbf16, #tpu.memory_space<vmem>>, vector<8x72xbf16>
    %cst_295 = arith.constant dense<0.000000e+00> : vector<8x16xf32>
    %447 = tpu.matmul %446, %445, %cst_295 {dimension_numbers = #tpu.dot_dimension_numbers<[1], [0], [0], [1], [0, 0, 1, 1], [], []>} : vector<8x72xbf16>, vector<72x16xbf16>, vector<8x16xf32> -> vector<8x16xf32>
    %c0_296 = arith.constant 0 : index
    %c0_297 = arith.constant 0 : index
    %c14 = arith.constant 14 : index
    %c0_298 = arith.constant 0 : index
    %448 = vector.load %arg4[%c0_296, %c0_297, %c14, %c0_298] : memref<1x8x16x16xf32, #tpu.memory_space<vmem>>, vector<1x8x1x16xf32>
    %449 = vector.shape_cast %448 : vector<1x8x1x16xf32> to vector<8x16xf32>
    %450 = vector.shape_cast %447 : vector<8x16xf32> to vector<1x8x1x16xf32>
    tpu.vector_store %arg4[%c0_296, %c0_297, %c14, %c0_298], %450 {strides = array<i32>} : memref<1x8x16x16xf32, #tpu.memory_space<vmem>>, vector<1x8x1x16xf32>,
    %c15_i32 = arith.constant 15 : i32
    %451 = arith.addi %0, %c15_i32 : i32
    %c0_i32_299 = arith.constant 0 : i32
    %452 = arith.addi %451, %c0_i32_299 : i32
    %c0_300 = arith.constant 0 : index
    %453 = arith.index_cast %452 : i32 to index
    %c0_301 = arith.constant 0 : index
    %c0_302 = arith.constant 0 : index
    %454 = vector.load %arg2[%c0_300, %453, %c0_301, %c0_302] : memref<1x18x8x18xbf16, #tpu.memory_space<vmem>>, vector<1x1x8x18xbf16>
    %455 = vector.shape_cast %454 : vector<1x1x8x18xbf16> to vector<8x18xbf16>
    %456 = vector.extract_strided_slice %455 {offsets = [0, 0], sizes = [8, 16], strides = [1, 1]} : vector<8x18xbf16> to vector<8x16xbf16>
    %457 = vector.extract_strided_slice %455 {offsets = [0, 1], sizes = [8, 16], strides = [1, 1]} : vector<8x18xbf16> to vector<8x16xbf16>
    %458 = vector.extract_strided_slice %455 {offsets = [0, 2], sizes = [8, 16], strides = [1, 1]} : vector<8x18xbf16> to vector<8x16xbf16>
    %c15_i32_303 = arith.constant 15 : i32
    %459 = arith.addi %0, %c15_i32_303 : i32
    %c1_i32_304 = arith.constant 1 : i32
    %460 = arith.addi %459, %c1_i32_304 : i32
    %c0_305 = arith.constant 0 : index
    %461 = arith.index_cast %460 : i32 to index
    %c0_306 = arith.constant 0 : index
    %c0_307 = arith.constant 0 : index
    %462 = vector.load %arg2[%c0_305, %461, %c0_306, %c0_307] : memref<1x18x8x18xbf16, #tpu.memory_space<vmem>>, vector<1x1x8x18xbf16>
    %463 = vector.shape_cast %462 : vector<1x1x8x18xbf16> to vector<8x18xbf16>
    %464 = vector.extract_strided_slice %463 {offsets = [0, 0], sizes = [8, 16], strides = [1, 1]} : vector<8x18xbf16> to vector<8x16xbf16>
    %465 = vector.extract_strided_slice %463 {offsets = [0, 1], sizes = [8, 16], strides = [1, 1]} : vector<8x18xbf16> to vector<8x16xbf16>
    %466 = vector.extract_strided_slice %463 {offsets = [0, 2], sizes = [8, 16], strides = [1, 1]} : vector<8x18xbf16> to vector<8x16xbf16>
    %c15_i32_308 = arith.constant 15 : i32
    %467 = arith.addi %0, %c15_i32_308 : i32
    %c2_i32_309 = arith.constant 2 : i32
    %468 = arith.addi %467, %c2_i32_309 : i32
    %c0_310 = arith.constant 0 : index
    %469 = arith.index_cast %468 : i32 to index
    %c0_311 = arith.constant 0 : index
    %c0_312 = arith.constant 0 : index
    %470 = vector.load %arg2[%c0_310, %469, %c0_311, %c0_312] : memref<1x18x8x18xbf16, #tpu.memory_space<vmem>>, vector<1x1x8x18xbf16>
    %471 = vector.shape_cast %470 : vector<1x1x8x18xbf16> to vector<8x18xbf16>
    %472 = vector.extract_strided_slice %471 {offsets = [0, 0], sizes = [8, 16], strides = [1, 1]} : vector<8x18xbf16> to vector<8x16xbf16>
    %473 = vector.extract_strided_slice %471 {offsets = [0, 1], sizes = [8, 16], strides = [1, 1]} : vector<8x18xbf16> to vector<8x16xbf16>
    %474 = vector.extract_strided_slice %471 {offsets = [0, 2], sizes = [8, 16], strides = [1, 1]} : vector<8x18xbf16> to vector<8x16xbf16>
    %475 = tpu.concatenate %456, %457, %458, %464, %465, %466, %472, %473, %474 in 0 : vector<8x16xbf16>, vector<8x16xbf16>, vector<8x16xbf16>, vector<8x16xbf16>, vector<8x16xbf16>, vector<8x16xbf16>, vector<8x16xbf16>, vector<8x16xbf16>, vector<8x16xbf16> -> vector<72x16xbf16>
    %c0_313 = arith.constant 0 : index
    %c0_314 = arith.constant 0 : index
    %476 = vector.load %arg3[%c0_313, %c0_314] : memref<8x72xbf16, #tpu.memory_space<vmem>>, vector<8x72xbf16>
    %cst_315 = arith.constant dense<0.000000e+00> : vector<8x16xf32>
    %477 = tpu.matmul %476, %475, %cst_315 {dimension_numbers = #tpu.dot_dimension_numbers<[1], [0], [0], [1], [0, 0, 1, 1], [], []>} : vector<8x72xbf16>, vector<72x16xbf16>, vector<8x16xf32> -> vector<8x16xf32>
    %c0_316 = arith.constant 0 : index
    %c0_317 = arith.constant 0 : index
    %c15 = arith.constant 15 : index
    %c0_318 = arith.constant 0 : index
    %478 = vector.load %arg4[%c0_316, %c0_317, %c15, %c0_318] : memref<1x8x16x16xf32, #tpu.memory_space<vmem>>, vector<1x8x1x16xf32>
    %479 = vector.shape_cast %478 : vector<1x8x1x16xf32> to vector<8x16xf32>
    %480 = vector.shape_cast %477 : vector<8x16xf32> to vector<1x8x1x16xf32>
    tpu.vector_store %arg4[%c0_316, %c0_317, %c15, %c0_318], %480 {strides = array<i32>} : memref<1x8x16x16xf32, #tpu.memory_space<vmem>>, vector<1x8x1x16xf32>,
    return
  }
  func.func @transform_0(%arg0: i32, %arg1: i32) -> (i32, i32, i32, i32) {
    %c0_i32 = arith.constant 0 : i32
    %c0_i32_0 = arith.constant 0 : i32
    %c0_i32_1 = arith.constant 0 : i32
    %c0_i32_2 = arith.constant 0 : i32
    return %arg0, %c0_i32, %c0_i32_0, %c0_i32_1 : i32, i32, i32, i32
  }
  func.func @transform_1(%arg0: i32, %arg1: i32) -> (i32, i32) {
    %c0_i32 = arith.constant 0 : i32
    %c0_i32_0 = arith.constant 0 : i32
    %c0_i32_1 = arith.constant 0 : i32
    return %c0_i32, %c0_i32_0 : i32, i32
  }
  func.func @transform_2(%arg0: i32, %arg1: i32) -> (i32, i32, i32, i32) {
    %c0_i32 = arith.constant 0 : i32
    %c0_i32_0 = arith.constant 0 : i32
    %c0_i32_1 = arith.constant 0 : i32
    return %arg0, %c0_i32, %arg1, %c0_i32_0 : i32, i32, i32, i32
  }
}

</mosaic_0001>

<llo_original>
// kernel: conv2d_forward.1
$region0: #{conv2d_forward.1}
  #allocation0 [shape = 'u32[]', space=smem, size = 0x4, offset = 0x4, fixed_abs, tag = 'smem constant byte address 0x4 - core index']
  #allocation1 [shape = 'u32[72,128]{1,0:T(1,128)}', space=vmem, size = 0x9000, scoped, tag = 'internal scratch']
  %s0 = inlined_call_operand.vmem [shape: bf16[2,18,8,18], index: 0, kind: input, shape index: {}]
  %s1 = inlined_call_operand.vmem [shape: bf16[8,72], index: 1, kind: input, shape index: {}]
  %s2 = inlined_call_operand.hbm [shape: f32[2,8,16,16], index: 2, kind: output, shape index: {}]
  %s3 = sld [smem:[#allocation0]]
  $region41: #{conv2d_forward.1} parent=0
    _
  %s5 = ssub.s32 1, %s3
  %s6 = scalar_select 0, %s5, %s3
  $region1: #{conv2d_forward.1} parent=0
    #allocation2 [shape = 'u8[131072]{0}', space=vmem, size = 0x20000, scoped, tag = 'output window, operand 0']
    #allocation3 [shape = 's32[2]{0}', space=sflag, size = 0x8, scoped, tag = 'scoped memory for conv2d_forward.1']
    %7 = vsyncpa [#allocation3], 0
    %s8 = scalar_lea.sflag [#allocation3], 1
    %9 = vsyncpa %s8, 0
    loop: start=0, step=1, limit=4
    $region2: #{conv2d_forward.1} parent=1 // loop_pre_header
      _
    $region3: #{conv2d_forward.1} parent=1 // loop_header
      %s11 = sphi 0, %s15
      %p12 = scmp.ge.s32.totalorder %s11, 4
      %s18 = sphi 0, %s30
      %s19 = sphi 0, %s26
      %s20 = sphi 0, %s18
      %s21 = sphi 0, %s19
      %s22 = sphi 0, %s20
      %s23 = sphi 0, %s21
      %s33 = sphi 0, %s35
      %s36 = sphi 0, %s33
      %s37 = sphi 0, %s36
      %s53 = sphi 0, %s37
      %s57 = sphi 0, %s57
      %s59 = sphi 0, %s57
      %s60 = sphi 0, %s59
      %s74 = sphi 0, %s60
      %s82 = sphi 0, %s84
      %s85 = sphi 0, %s82
      %s86 = sphi 0, %s85
      %s102 = sphi 0, %s86
    $region4: #{conv2d_forward.1} parent=1 // loop_header_branch
      %14 = sbr.rel (%p12) target = $region8
    $region5: #{conv2d_forward.1} parent=1 // loop_body
      %s16 = ssub.s32 %s11, 1
      %s17 = ssub.s32 %s11, 2
      %s24 = sadd.s32 1, %s19
      %p25 = scmp.ge.s32.totalorder %s24, 1
      %s26 = scalar_select %p25, 0, %s24
      %s27 = sadd.s32 1, %s18
      %s28 = scalar_select %p25, %s27, %s18
      %p29 = scmp.ge.s32.totalorder %s28, 2
      %s30 = scalar_select %p29, 0, %s28
      %s31 = ssub.s32 %s18, %s30
      %p32 = scmp.eq.s32.totalorder %s31, 0
      %s34 = sadd.s32 %s33, 1
      %s35 = scalar_select %p32, %s33, %s34
      %p38 = pneg %p32
      %p39 = scmp.eq.s32.totalorder %s11, 1
      %p40 = por %p38, %p39
      %p41 = scmp.ne.s32.totalorder %s33, %s36
      %p42 = scmp.eq.s32.totalorder %s11, 0
      %p43 = por %p41, %p42
      %p44 = scmp.ne.s32.totalorder %s33, %s36
      %p45 = scmp.eq.s32.totalorder %s16, 1
      %p46 = por %p44, %p45
      %p47 = scmp.ne.s32.totalorder %s36, %s37
      %p48 = scmp.eq.s32.totalorder %s16, 0
      %p49 = por %p47, %p48
      %p50 = scmp.ne.s32.totalorder %s36, %s37
      %p51 = scmp.eq.s32.totalorder %s17, 1
      %p52 = por %p50, %p51
      %p54 = scmp.ne.s32.totalorder %s37, %s53
      %p55 = scmp.eq.s32.totalorder %s17, 0
      %p56 = por %p54, %p55
      %s58 = sadd.s32 %s57, 1
      %p61 = scmp.eq.s32.totalorder %s11, 1
      %p62 = scmp.ne.s32.totalorder %s57, %s59
      %p63 = scmp.eq.s32.totalorder %s11, 0
      %p64 = por %p62, %p63
      %p65 = scmp.ne.s32.totalorder %s57, %s59
      %p66 = scmp.eq.s32.totalorder %s16, 1
      %p67 = por %p65, %p66
      %p68 = scmp.ne.s32.totalorder %s59, %s60
      %p69 = scmp.eq.s32.totalorder %s16, 0
      %p70 = por %p68, %p69
      %p71 = scmp.ne.s32.totalorder %s59, %s60
      %p72 = scmp.eq.s32.totalorder %s17, 1
      %p73 = por %p71, %p72
      %p75 = scmp.ne.s32.totalorder %s60, %s74
      %p76 = scmp.eq.s32.totalorder %s17, 0
      %p77 = por %p75, %p76
      %s78 = ssub.s32 %s18, %s30
      %s79 = ssub.s32 %s19, %s26
      %s80 = sor.u32 %s78, %s79
      %p81 = scmp.eq.s32.totalorder %s80, 0
      %s83 = sadd.s32 %s82, 1
      %s84 = scalar_select %p81, %s82, %s83
      %p87 = pneg %p81
      %p88 = scmp.eq.s32.totalorder %s11, 1
      %p89 = por %p87, %p88
      %p90 = scmp.ne.s32.totalorder %s82, %s85
      %p91 = scmp.eq.s32.totalorder %s11, 0
      %p92 = por %p90, %p91
      %p93 = scmp.ne.s32.totalorder %s82, %s85
      %p94 = scmp.eq.s32.totalorder %s16, 1
      %p95 = por %p93, %p94
      %p96 = scmp.ne.s32.totalorder %s85, %s86
      %p97 = scmp.eq.s32.totalorder %s16, 0
      %p98 = por %p96, %p97
      %p99 = scmp.ne.s32.totalorder %s85, %s86
      %p100 = scmp.eq.s32.totalorder %s17, 1
      %p101 = por %p99, %p100
      %p103 = scmp.ne.s32.totalorder %s86, %s102
      %p104 = scmp.eq.s32.totalorder %s17, 0
      %p105 = por %p103, %p104
      %p106 = scmp.le.s32.totalorder 1, %s11
      %p107 = scmp.lt.s32.totalorder %s11, 3
      %p108 = pnand %p106, %p107
      %p109 = pneg %p108
      // Predicated region
      $region9: #{conv2d_forward.1} parent=5 // pred_check
        _
      $region10: #{conv2d_forward.1} parent=5 // pred_check_branch
        %111 = sbr.rel (%p108) target = $region12
      $region11: #{conv2d_forward.1} parent=5 // pred_region
        %s112 = ssub.s32 %s11, 1
        // Predicated region
        $region13: #{conv2d_forward.1} parent=11 // pred_check
          %p113 = pneg %p70
        $region14: #{conv2d_forward.1} parent=11 // pred_check_branch
          %115 = sbr.rel (%p113) target = $region16
        $region15: #{conv2d_forward.1} parent=11 // pred_region
          _
        $region16: #{conv2d_forward.1} parent=11 // pred_fallthru
          _
      $region12: #{conv2d_forward.1} parent=5 // pred_fallthru
        _
      %p116 = scmp.lt.s32.totalorder %s11, 2
      // Predicated region
      $region17: #{conv2d_forward.1} parent=5 // pred_check
        %p117 = pneg %p116
      $region18: #{conv2d_forward.1} parent=5 // pred_check_branch
        %119 = sbr.rel (%p117) target = $region20
      $region19: #{conv2d_forward.1} parent=5 // pred_region
        // Predicated region
        $region21: #{conv2d_forward.1} parent=19 // pred_check
          %p120 = pneg %p43
        $region22: #{conv2d_forward.1} parent=19 // pred_check_branch
          %122 = sbr.rel (%p120) target = $region24
        $region23: #{conv2d_forward.1} parent=19 // pred_region
          %p123 = scmp.lt.s32.totalorder %s18, 1
          %s124 = scalar_select %p123, %s18, 1
          %s125 = smul.addr %s124, 18
          %s126 = smul.addr %s125, 4
          %s127 = scalar_lea.vmem %s0, %s126
        $region24: #{conv2d_forward.1} parent=19 // pred_fallthru
          _
      $region20: #{conv2d_forward.1} parent=5 // pred_fallthru
        _
      %p128 = scmp.le.s32.totalorder 1, %s11
      %p129 = scmp.lt.s32.totalorder %s11, 3
      %p130 = pnand %p128, %p129
      %p131 = pneg %p130
      // Predicated region
      $region25: #{conv2d_forward.1} parent=5 // pred_check
        _
      $region26: #{conv2d_forward.1} parent=5 // pred_check_branch
        %133 = sbr.rel (%p130) target = $region28
      $region27: #{conv2d_forward.1} parent=5 // pred_region
        %s134 = ssub.s32 %s11, 1
        %p135 = scmp.lt.s32.totalorder %s20, 1
        %s136 = scalar_select %p135, %s20, 1
        %s137 = smul.addr %s136, 18
        %s138 = smul.addr %s137, 4
        %s139 = scalar_lea.vmem %s0, %s138
        %p140 = pneg %p49
        %p141 = pneg %p46
        %p142 = pneg %p70
        %p143 = pneg %p67
        %p144 = pneg %p98
        %p145 = pneg %p95
        %s146 = sand.u32 %s85, 1
        %s147 = scalar_lea.sflag [#allocation3], %s146
        %s148 = sand.u32 %s85, 1
        %s149 = smul.addr %s148, 128
        %s150 = scalar_lea.vmem [#allocation2], %s149
        %p151 = scmp.lt.s32.totalorder %s20, 1
        %s152 = scalar_select %p151, %s20, 1
        %s153 = smul.addr %s152, 18
        %s154 = smul.addr %s153, 4
        %s155 = scalar_lea.vmem %s0, %s154
        %s156 = smul.u32 2, %s21
        %s158 = smul.u32 %s21, 16
        %s159 = smul.addr %s158, 4
        %s160 = scalar_lea.vmem %s155, %s159
        %v161 = vld [vmem:[%s160] sm:$0xf]
        %s162 = sadd.s32 %s158, 1
        %s163 = smul.addr %s162, 4
        %s164 = scalar_lea.vmem %s155, %s163
        %v165 = vld [vmem:[%s164] sm:$0xf]
        %s166 = sadd.s32 %s158, 2
        %s167 = smul.addr %s166, 4
        %s168 = scalar_lea.vmem %s155, %s167
        %v169 = vld [vmem:[%s168] sm:$0xf]
        %v171 = vunpack.c.l.b16 %v161
        %v172 = vpack.c.b16 %v171, %v171
        %173 = vrot.lane.b32.xlu0 %v172, 127
        %v174 = vpop.permute.xlu0 %173
        %175 = vrot.lane.b32.xlu0 %v172, 126
        %v176 = vpop.permute.xlu0 %175
        %v178 = vunpack.c.l.b16 %v165
        %v179 = vpack.c.b16 %v178, %v178
        %180 = vrot.lane.b32.xlu0 %v179, 127
        %v181 = vpop.permute.xlu0 %180
        %182 = vrot.lane.b32.xlu0 %v179, 126
        %v183 = vpop.permute.xlu0 %182
        %v185 = vunpack.c.l.b16 %v169
        %v186 = vpack.c.b16 %v185, %v185
        %187 = vrot.lane.b32.xlu0 %v186, 127
        %v188 = vpop.permute.xlu0 %187
        %189 = vrot.lane.b32.xlu0 %v186, 126
        %v190 = vpop.permute.xlu0 %189
        %vm191 = vcmask 1043456
        %v194 = vsel %vm191, %v161, %v174
        %v198 = vsel %vm191, %v176, %v179
        %v202 = vsel %vm191, %v181, %v183
        %v206 = vsel %vm191, %v169, %v188
        %v208 = vld [vmem:[%s1] sm:$0xf]
        %vm209 = vcmask 588800
        %v211 = vsel %vm209, %v208, 0
        %v214 = vsel %vm191, %v190, 0
        %216 = vmatpush.bf16.msra.mxu0 0
        %217 = vmatpush.bf16.msra.mxu0 0
        %218 = vmatpush.bf16.msra.mxu0 0
        %219 = vmatpush.bf16.msra.mxu0 %v214
        %220 = vmatpush.bf16.msra.mxu0 %v206
        %221 = vmatpush.bf16.msra.mxu0 %v202
        %222 = vmatpush.bf16.msra.mxu0 %v198
        %223 = vmatpush.bf16.msra.mxu0 %v194
        %224 = vmatmul.bf16.gmra.mxu0 %v211
        %v225 = vpop.f32.mrf.mxu0
        %v226 = vadd.f32 0.0, %v225
        %v227 = vpop.f32.mrf.mxu0
        %228 = vdwg.mxu0
        %v230 = vrot.slane %v226, 1
        %v231 = vrot.slane %v226, 2
        %v232 = vrot.slane %v226, 3
        %v233 = vrot.slane %v226, 4
        %v234 = vrot.slane %v226, 5
        %v235 = vrot.slane %v226, 6
        %v236 = vrot.slane %v226, 7
        %vm244 = vcmask 122880
        %245 = vst.msk [vmem:[%s150] sm:$0x1] %vm244, %v226
        %246 = vst.msk [vmem:[%s150 + $0x10] sm:$0x1] %vm244, %v230
        %247 = vst.msk [vmem:[%s150 + $0x20] sm:$0x1] %vm244, %v231
        %248 = vst.msk [vmem:[%s150 + $0x30] sm:$0x1] %vm244, %v232
        %249 = vst.msk [vmem:[%s150 + $0x40] sm:$0x1] %vm244, %v233
        %250 = vst.msk [vmem:[%s150 + $0x50] sm:$0x1] %vm244, %v234
        %251 = vst.msk [vmem:[%s150 + $0x60] sm:$0x1] %vm244, %v235
        %252 = vst.msk [vmem:[%s150 + $0x70] sm:$0x1] %vm244, %v236
        %v253 = vld [vmem:[%s164] sm:$0xf]
        %v254 = vld [vmem:[%s168] sm:$0xf]
        %s255 = sadd.s32 %s158, 3
        %s256 = smul.addr %s255, 4
        %s257 = scalar_lea.vmem %s155, %s256
        %v258 = vld [vmem:[%s257] sm:$0xf]
        %v260 = vunpack.c.l.b16 %v253
        %v261 = vpack.c.b16 %v260, %v260
        %262 = vrot.lane.b32.xlu0 %v261, 127
        %v263 = vpop.permute.xlu0 %262
        %264 = vrot.lane.b32.xlu0 %v261, 126
        %v265 = vpop.permute.xlu0 %264
        %v267 = vunpack.c.l.b16 %v254
        %v268 = vpack.c.b16 %v267, %v267
        %269 = vrot.lane.b32.xlu0 %v268, 127
        %v270 = vpop.permute.xlu0 %269
        %271 = vrot.lane.b32.xlu0 %v268, 126
        %v272 = vpop.permute.xlu0 %271
        %v274 = vunpack.c.l.b16 %v258
        %v275 = vpack.c.b16 %v274, %v274
        %276 = vrot.lane.b32.xlu0 %v275, 127
        %v277 = vpop.permute.xlu0 %276
        %278 = vrot.lane.b32.xlu0 %v275, 126
        %v279 = vpop.permute.xlu0 %278
        %v282 = vsel %vm191, %v253, %v263
        %v286 = vsel %vm191, %v265, %v268
        %v290 = vsel %vm191, %v270, %v272
        %v294 = vsel %vm191, %v258, %v277
        %v296 = vld [vmem:[%s1] sm:$0xf]
        %v298 = vsel %vm209, %v296, 0
        %v301 = vsel %vm191, %v279, 0
        %303 = vmatpush.bf16.msra.mxu0 0
        %304 = vmatpush.bf16.msra.mxu0 0
        %305 = vmatpush.bf16.msra.mxu0 0
        %306 = vmatpush.bf16.msra.mxu0 %v301
        %307 = vmatpush.bf16.msra.mxu0 %v294
        %308 = vmatpush.bf16.msra.mxu0 %v290
        %309 = vmatpush.bf16.msra.mxu0 %v286
        %310 = vmatpush.bf16.msra.mxu0 %v282
        %311 = vmatmul.bf16.gmra.mxu0 %v298
        %v312 = vpop.f32.mrf.mxu0
        %v313 = vadd.f32 0.0, %v312
        %v314 = vpop.f32.mrf.mxu0
        %315 = vdwg.mxu0
        %v317 = vrot.slane %v313, 1
        %v318 = vrot.slane %v313, 2
        %v319 = vrot.slane %v313, 3
        %v320 = vrot.slane %v313, 4
        %v321 = vrot.slane %v313, 5
        %v322 = vrot.slane %v313, 6
        %v323 = vrot.slane %v313, 7
        %331 = vst.msk [vmem:[%s150 + $0x1] sm:$0x1] %vm244, %v313
        %332 = vst.msk [vmem:[%s150 + $0x11] sm:$0x1] %vm244, %v317
        %333 = vst.msk [vmem:[%s150 + $0x21] sm:$0x1] %vm244, %v318
        %334 = vst.msk [vmem:[%s150 + $0x31] sm:$0x1] %vm244, %v319
        %335 = vst.msk [vmem:[%s150 + $0x41] sm:$0x1] %vm244, %v320
        %336 = vst.msk [vmem:[%s150 + $0x51] sm:$0x1] %vm244, %v321
        %337 = vst.msk [vmem:[%s150 + $0x61] sm:$0x1] %vm244, %v322
        %338 = vst.msk [vmem:[%s150 + $0x71] sm:$0x1] %vm244, %v323
        %v339 = vld [vmem:[%s168] sm:$0xf]
        %v340 = vld [vmem:[%s257] sm:$0xf]
        %s341 = sadd.s32 %s158, 4
        %s342 = smul.addr %s341, 4
        %s343 = scalar_lea.vmem %s155, %s342
        %v344 = vld [vmem:[%s343] sm:$0xf]
        %v346 = vunpack.c.l.b16 %v339
        %v347 = vpack.c.b16 %v346, %v346
        %348 = vrot.lane.b32.xlu0 %v347, 127
        %v349 = vpop.permute.xlu0 %348
        %350 = vrot.lane.b32.xlu0 %v347, 126
        %v351 = vpop.permute.xlu0 %350
        %v353 = vunpack.c.l.b16 %v340
        %v354 = vpack.c.b16 %v353, %v353
        %355 = vrot.lane.b32.xlu0 %v354, 127
        %v356 = vpop.permute.xlu0 %355
        %357 = vrot.lane.b32.xlu0 %v354, 126
        %v358 = vpop.permute.xlu0 %357
        %v360 = vunpack.c.l.b16 %v344
        %v361 = vpack.c.b16 %v360, %v360
        %362 = vrot.lane.b32.xlu0 %v361, 127
        %v363 = vpop.permute.xlu0 %362
        %364 = vrot.lane.b32.xlu0 %v361, 126
        %v365 = vpop.permute.xlu0 %364
        %v368 = vsel %vm191, %v339, %v349
        %v372 = vsel %vm191, %v351, %v354
        %v376 = vsel %vm191, %v356, %v358
        %v380 = vsel %vm191, %v344, %v363
        %v382 = vld [vmem:[%s1] sm:$0xf]
        %v384 = vsel %vm209, %v382, 0
        %v387 = vsel %vm191, %v365, 0
        %389 = vmatpush.bf16.msra.mxu0 0
        %390 = vmatpush.bf16.msra.mxu0 0
        %391 = vmatpush.bf16.msra.mxu0 0
        %392 = vmatpush.bf16.msra.mxu0 %v387
        %393 = vmatpush.bf16.msra.mxu0 %v380
        %394 = vmatpush.bf16.msra.mxu0 %v376
        %395 = vmatpush.bf16.msra.mxu0 %v372
        %396 = vmatpush.bf16.msra.mxu0 %v368
        %397 = vmatmul.bf16.gmra.mxu0 %v384
        %v398 = vpop.f32.mrf.mxu0
        %v399 = vadd.f32 0.0, %v398
        %v400 = vpop.f32.mrf.mxu0
        %401 = vdwg.mxu0
        %v403 = vrot.slane %v399, 1
        %v404 = vrot.slane %v399, 2
        %v405 = vrot.slane %v399, 3
        %v406 = vrot.slane %v399, 4
        %v407 = vrot.slane %v399, 5
        %v408 = vrot.slane %v399, 6
        %v409 = vrot.slane %v399, 7
        %417 = vst.msk [vmem:[%s150 + $0x2] sm:$0x1] %vm244, %v399
        %418 = vst.msk [vmem:[%s150 + $0x12] sm:$0x1] %vm244, %v403
        %419 = vst.msk [vmem:[%s150 + $0x22] sm:$0x1] %vm244, %v404
        %420 = vst.msk [vmem:[%s150 + $0x32] sm:$0x1] %vm244, %v405
        %421 = vst.msk [vmem:[%s150 + $0x42] sm:$0x1] %vm244, %v406
        %422 = vst.msk [vmem:[%s150 + $0x52] sm:$0x1] %vm244, %v407
        %423 = vst.msk [vmem:[%s150 + $0x62] sm:$0x1] %vm244, %v408
        %424 = vst.msk [vmem:[%s150 + $0x72] sm:$0x1] %vm244, %v409
        %v425 = vld [vmem:[%s257] sm:$0xf]
        %v426 = vld [vmem:[%s343] sm:$0xf]
        %s427 = sadd.s32 %s158, 5
        %s428 = smul.addr %s427, 4
        %s429 = scalar_lea.vmem %s155, %s428
        %v430 = vld [vmem:[%s429] sm:$0xf]
        %v432 = vunpack.c.l.b16 %v425
        %v433 = vpack.c.b16 %v432, %v432
        %434 = vrot.lane.b32.xlu0 %v433, 127
        %v435 = vpop.permute.xlu0 %434
        %436 = vrot.lane.b32.xlu0 %v433, 126
        %v437 = vpop.permute.xlu0 %436
        %v439 = vunpack.c.l.b16 %v426
        %v440 = vpack.c.b16 %v439, %v439
        %441 = vrot.lane.b32.xlu0 %v440, 127
        %v442 = vpop.permute.xlu0 %441
        %443 = vrot.lane.b32.xlu0 %v440, 126
        %v444 = vpop.permute.xlu0 %443
        %v446 = vunpack.c.l.b16 %v430
        %v447 = vpack.c.b16 %v446, %v446
        %448 = vrot.lane.b32.xlu0 %v447, 127
        %v449 = vpop.permute.xlu0 %448
        %450 = vrot.lane.b32.xlu0 %v447, 126
        %v451 = vpop.permute.xlu0 %450
        %v454 = vsel %vm191, %v425, %v435
        %v458 = vsel %vm191, %v437, %v440
        %v462 = vsel %vm191, %v442, %v444
        %v466 = vsel %vm191, %v430, %v449
        %v468 = vld [vmem:[%s1] sm:$0xf]
        %v470 = vsel %vm209, %v468, 0
        %v473 = vsel %vm191, %v451, 0
        %475 = vmatpush.bf16.msra.mxu0 0
        %476 = vmatpush.bf16.msra.mxu0 0
        %477 = vmatpush.bf16.msra.mxu0 0
        %478 = vmatpush.bf16.msra.mxu0 %v473
        %479 = vmatpush.bf16.msra.mxu0 %v466
        %480 = vmatpush.bf16.msra.mxu0 %v462
        %481 = vmatpush.bf16.msra.mxu0 %v458
        %482 = vmatpush.bf16.msra.mxu0 %v454
        %483 = vmatmul.bf16.gmra.mxu0 %v470
        %v484 = vpop.f32.mrf.mxu0
        %v485 = vadd.f32 0.0, %v484
        %v486 = vpop.f32.mrf.mxu0
        %487 = vdwg.mxu0
        %v489 = vrot.slane %v485, 1
        %v490 = vrot.slane %v485, 2
        %v491 = vrot.slane %v485, 3
        %v492 = vrot.slane %v485, 4
        %v493 = vrot.slane %v485, 5
        %v494 = vrot.slane %v485, 6
        %v495 = vrot.slane %v485, 7
        %503 = vst.msk [vmem:[%s150 + $0x3] sm:$0x1] %vm244, %v485
        %504 = vst.msk [vmem:[%s150 + $0x13] sm:$0x1] %vm244, %v489
        %505 = vst.msk [vmem:[%s150 + $0x23] sm:$0x1] %vm244, %v490
        %506 = vst.msk [vmem:[%s150 + $0x33] sm:$0x1] %vm244, %v491
        %507 = vst.msk [vmem:[%s150 + $0x43] sm:$0x1] %vm244, %v492
        %508 = vst.msk [vmem:[%s150 + $0x53] sm:$0x1] %vm244, %v493
        %509 = vst.msk [vmem:[%s150 + $0x63] sm:$0x1] %vm244, %v494
        %510 = vst.msk [vmem:[%s150 + $0x73] sm:$0x1] %vm244, %v495
        %v511 = vld [vmem:[%s343] sm:$0xf]
        %v512 = vld [vmem:[%s429] sm:$0xf]
        %s513 = sadd.s32 %s158, 6
        %s514 = smul.addr %s513, 4
        %s515 = scalar_lea.vmem %s155, %s514
        %v516 = vld [vmem:[%s515] sm:$0xf]
        %v518 = vunpack.c.l.b16 %v511
        %v519 = vpack.c.b16 %v518, %v518
        %520 = vrot.lane.b32.xlu0 %v519, 127
        %v521 = vpop.permute.xlu0 %520
        %522 = vrot.lane.b32.xlu0 %v519, 126
        %v523 = vpop.permute.xlu0 %522
        %v525 = vunpack.c.l.b16 %v512
        %v526 = vpack.c.b16 %v525, %v525
        %527 = vrot.lane.b32.xlu0 %v526, 127
        %v528 = vpop.permute.xlu0 %527
        %529 = vrot.lane.b32.xlu0 %v526, 126
        %v530 = vpop.permute.xlu0 %529
        %v532 = vunpack.c.l.b16 %v516
        %v533 = vpack.c.b16 %v532, %v532
        %534 = vrot.lane.b32.xlu0 %v533, 127
        %v535 = vpop.permute.xlu0 %534
        %536 = vrot.lane.b32.xlu0 %v533, 126
        %v537 = vpop.permute.xlu0 %536
        %v540 = vsel %vm191, %v511, %v521
        %v544 = vsel %vm191, %v523, %v526
        %v548 = vsel %vm191, %v528, %v530
        %v552 = vsel %vm191, %v516, %v535
        %v554 = vld [vmem:[%s1] sm:$0xf]
        %v556 = vsel %vm209, %v554, 0
        %v559 = vsel %vm191, %v537, 0
        %561 = vmatpush.bf16.msra.mxu0 0
        %562 = vmatpush.bf16.msra.mxu0 0
        %563 = vmatpush.bf16.msra.mxu0 0
        %564 = vmatpush.bf16.msra.mxu0 %v559
        %565 = vmatpush.bf16.msra.mxu0 %v552
        %566 = vmatpush.bf16.msra.mxu0 %v548
        %567 = vmatpush.bf16.msra.mxu0 %v544
        %568 = vmatpush.bf16.msra.mxu0 %v540
        %569 = vmatmul.bf16.gmra.mxu0 %v556
        %v570 = vpop.f32.mrf.mxu0
        %v571 = vadd.f32 0.0, %v570
        %v572 = vpop.f32.mrf.mxu0
        %573 = vdwg.mxu0
        %v575 = vrot.slane %v571, 1
        %v576 = vrot.slane %v571, 2
        %v577 = vrot.slane %v571, 3
        %v578 = vrot.slane %v571, 4
        %v579 = vrot.slane %v571, 5
        %v580 = vrot.slane %v571, 6
        %v581 = vrot.slane %v571, 7
        %589 = vst.msk [vmem:[%s150 + $0x4] sm:$0x1] %vm244, %v571
        %590 = vst.msk [vmem:[%s150 + $0x14] sm:$0x1] %vm244, %v575
        %591 = vst.msk [vmem:[%s150 + $0x24] sm:$0x1] %vm244, %v576
        %592 = vst.msk [vmem:[%s150 + $0x34] sm:$0x1] %vm244, %v577
        %593 = vst.msk [vmem:[%s150 + $0x44] sm:$0x1] %vm244, %v578
        %594 = vst.msk [vmem:[%s150 + $0x54] sm:$0x1] %vm244, %v579
        %595 = vst.msk [vmem:[%s150 + $0x64] sm:$0x1] %vm244, %v580
        %596 = vst.msk [vmem:[%s150 + $0x74] sm:$0x1] %vm244, %v581
        %v597 = vld [vmem:[%s429] sm:$0xf]
        %v598 = vld [vmem:[%s515] sm:$0xf]
        %s599 = sadd.s32 %s158, 7
        %s600 = smul.addr %s599, 4
        %s601 = scalar_lea.vmem %s155, %s600
        %v602 = vld [vmem:[%s601] sm:$0xf]
        %v604 = vunpack.c.l.b16 %v597
        %v605 = vpack.c.b16 %v604, %v604
        %606 = vrot.lane.b32.xlu0 %v605, 127
        %v607 = vpop.permute.xlu0 %606
        %608 = vrot.lane.b32.xlu0 %v605, 126
        %v609 = vpop.permute.xlu0 %608
        %v611 = vunpack.c.l.b16 %v598
        %v612 = vpack.c.b16 %v611, %v611
        %613 = vrot.lane.b32.xlu0 %v612, 127
        %v614 = vpop.permute.xlu0 %613
        %615 = vrot.lane.b32.xlu0 %v612, 126
        %v616 = vpop.permute.xlu0 %615
        %v618 = vunpack.c.l.b16 %v602
        %v619 = vpack.c.b16 %v618, %v618
        %620 = vrot.lane.b32.xlu0 %v619, 127
        %v621 = vpop.permute.xlu0 %620
        %622 = vrot.lane.b32.xlu0 %v619, 126
        %v623 = vpop.permute.xlu0 %622
        %v626 = vsel %vm191, %v597, %v607
        %v630 = vsel %vm191, %v609, %v612
        %v634 = vsel %vm191, %v614, %v616
        %v638 = vsel %vm191, %v602, %v621
        %v640 = vld [vmem:[%s1] sm:$0xf]
        %v642 = vsel %vm209, %v640, 0
        %v645 = vsel %vm191, %v623, 0
        %647 = vmatpush.bf16.msra.mxu0 0
        %648 = vmatpush.bf16.msra.mxu0 0
        %649 = vmatpush.bf16.msra.mxu0 0
        %650 = vmatpush.bf16.msra.mxu0 %v645
        %651 = vmatpush.bf16.msra.mxu0 %v638
        %652 = vmatpush.bf16.msra.mxu0 %v634
        %653 = vmatpush.bf16.msra.mxu0 %v630
        %654 = vmatpush.bf16.msra.mxu0 %v626
        %655 = vmatmul.bf16.gmra.mxu0 %v642
        %v656 = vpop.f32.mrf.mxu0
        %v657 = vadd.f32 0.0, %v656
        %v658 = vpop.f32.mrf.mxu0
        %659 = vdwg.mxu0
        %v661 = vrot.slane %v657, 1
        %v662 = vrot.slane %v657, 2
        %v663 = vrot.slane %v657, 3
        %v664 = vrot.slane %v657, 4
        %v665 = vrot.slane %v657, 5
        %v666 = vrot.slane %v657, 6
        %v667 = vrot.slane %v657, 7
        %675 = vst.msk [vmem:[%s150 + $0x5] sm:$0x1] %vm244, %v657
        %676 = vst.msk [vmem:[%s150 + $0x15] sm:$0x1] %vm244, %v661
        %677 = vst.msk [vmem:[%s150 + $0x25] sm:$0x1] %vm244, %v662
        %678 = vst.msk [vmem:[%s150 + $0x35] sm:$0x1] %vm244, %v663
        %679 = vst.msk [vmem:[%s150 + $0x45] sm:$0x1] %vm244, %v664
        %680 = vst.msk [vmem:[%s150 + $0x55] sm:$0x1] %vm244, %v665
        %681 = vst.msk [vmem:[%s150 + $0x65] sm:$0x1] %vm244, %v666
        %682 = vst.msk [vmem:[%s150 + $0x75] sm:$0x1] %vm244, %v667
        %v683 = vld [vmem:[%s515] sm:$0xf]
        %v684 = vld [vmem:[%s601] sm:$0xf]
        %s685 = sadd.s32 %s158, 8
        %s686 = smul.addr %s685, 4
        %s687 = scalar_lea.vmem %s155, %s686
        %v688 = vld [vmem:[%s687] sm:$0xf]
        %v690 = vunpack.c.l.b16 %v683
        %v691 = vpack.c.b16 %v690, %v690
        %692 = vrot.lane.b32.xlu0 %v691, 127
        %v693 = vpop.permute.xlu0 %692
        %694 = vrot.lane.b32.xlu0 %v691, 126
        %v695 = vpop.permute.xlu0 %694
        %v697 = vunpack.c.l.b16 %v684
        %v698 = vpack.c.b16 %v697, %v697
        %699 = vrot.lane.b32.xlu0 %v698, 127
        %v700 = vpop.permute.xlu0 %699
        %701 = vrot.lane.b32.xlu0 %v698, 126
        %v702 = vpop.permute.xlu0 %701
        %v704 = vunpack.c.l.b16 %v688
        %v705 = vpack.c.b16 %v704, %v704
        %706 = vrot.lane.b32.xlu0 %v705, 127
        %v707 = vpop.permute.xlu0 %706
        %708 = vrot.lane.b32.xlu0 %v705, 126
        %v709 = vpop.permute.xlu0 %708
        %v712 = vsel %vm191, %v683, %v693
        %v716 = vsel %vm191, %v695, %v698
        %v720 = vsel %vm191, %v700, %v702
        %v724 = vsel %vm191, %v688, %v707
        %v726 = vld [vmem:[%s1] sm:$0xf]
        %v728 = vsel %vm209, %v726, 0
        %v731 = vsel %vm191, %v709, 0
        %733 = vmatpush.bf16.msra.mxu0 0
        %734 = vmatpush.bf16.msra.mxu0 0
        %735 = vmatpush.bf16.msra.mxu0 0
        %736 = vmatpush.bf16.msra.mxu0 %v731
        %737 = vmatpush.bf16.msra.mxu0 %v724
        %738 = vmatpush.bf16.msra.mxu0 %v720
        %739 = vmatpush.bf16.msra.mxu0 %v716
        %740 = vmatpush.bf16.msra.mxu0 %v712
        %741 = vmatmul.bf16.gmra.mxu0 %v728
        %v742 = vpop.f32.mrf.mxu0
        %v743 = vadd.f32 0.0, %v742
        %v744 = vpop.f32.mrf.mxu0
        %745 = vdwg.mxu0
        %v747 = vrot.slane %v743, 1
        %v748 = vrot.slane %v743, 2
        %v749 = vrot.slane %v743, 3
        %v750 = vrot.slane %v743, 4
        %v751 = vrot.slane %v743, 5
        %v752 = vrot.slane %v743, 6
        %v753 = vrot.slane %v743, 7
        %761 = vst.msk [vmem:[%s150 + $0x6] sm:$0x1] %vm244, %v743
        %762 = vst.msk [vmem:[%s150 + $0x16] sm:$0x1] %vm244, %v747
        %763 = vst.msk [vmem:[%s150 + $0x26] sm:$0x1] %vm244, %v748
        %764 = vst.msk [vmem:[%s150 + $0x36] sm:$0x1] %vm244, %v749
        %765 = vst.msk [vmem:[%s150 + $0x46] sm:$0x1] %vm244, %v750
        %766 = vst.msk [vmem:[%s150 + $0x56] sm:$0x1] %vm244, %v751
        %767 = vst.msk [vmem:[%s150 + $0x66] sm:$0x1] %vm244, %v752
        %768 = vst.msk [vmem:[%s150 + $0x76] sm:$0x1] %vm244, %v753
        %v769 = vld [vmem:[%s601] sm:$0xf]
        %v770 = vld [vmem:[%s687] sm:$0xf]
        %s771 = sadd.s32 %s158, 9
        %s772 = smul.addr %s771, 4
        %s773 = scalar_lea.vmem %s155, %s772
        %v774 = vld [vmem:[%s773] sm:$0xf]
        %v776 = vunpack.c.l.b16 %v769
        %v777 = vpack.c.b16 %v776, %v776
        %778 = vrot.lane.b32.xlu0 %v777, 127
        %v779 = vpop.permute.xlu0 %778
        %780 = vrot.lane.b32.xlu0 %v777, 126
        %v781 = vpop.permute.xlu0 %780
        %v783 = vunpack.c.l.b16 %v770
        %v784 = vpack.c.b16 %v783, %v783
        %785 = vrot.lane.b32.xlu0 %v784, 127
        %v786 = vpop.permute.xlu0 %785
        %787 = vrot.lane.b32.xlu0 %v784, 126
        %v788 = vpop.permute.xlu0 %787
        %v790 = vunpack.c.l.b16 %v774
        %v791 = vpack.c.b16 %v790, %v790
        %792 = vrot.lane.b32.xlu0 %v791, 127
        %v793 = vpop.permute.xlu0 %792
        %794 = vrot.lane.b32.xlu0 %v791, 126
        %v795 = vpop.permute.xlu0 %794
        %v798 = vsel %vm191, %v769, %v779
        %v802 = vsel %vm191, %v781, %v784
        %v806 = vsel %vm191, %v786, %v788
        %v810 = vsel %vm191, %v774, %v793
        %v812 = vld [vmem:[%s1] sm:$0xf]
        %v814 = vsel %vm209, %v812, 0
        %v817 = vsel %vm191, %v795, 0
        %819 = vmatpush.bf16.msra.mxu0 0
        %820 = vmatpush.bf16.msra.mxu0 0
        %821 = vmatpush.bf16.msra.mxu0 0
        %822 = vmatpush.bf16.msra.mxu0 %v817
        %823 = vmatpush.bf16.msra.mxu0 %v810
        %824 = vmatpush.bf16.msra.mxu0 %v806
        %825 = vmatpush.bf16.msra.mxu0 %v802
        %826 = vmatpush.bf16.msra.mxu0 %v798
        %827 = vmatmul.bf16.gmra.mxu0 %v814
        %v828 = vpop.f32.mrf.mxu0
        %v829 = vadd.f32 0.0, %v828
        %v830 = vpop.f32.mrf.mxu0
        %831 = vdwg.mxu0
        %v833 = vrot.slane %v829, 1
        %v834 = vrot.slane %v829, 2
        %v835 = vrot.slane %v829, 3
        %v836 = vrot.slane %v829, 4
        %v837 = vrot.slane %v829, 5
        %v838 = vrot.slane %v829, 6
        %v839 = vrot.slane %v829, 7
        %847 = vst.msk [vmem:[%s150 + $0x7] sm:$0x1] %vm244, %v829
        %848 = vst.msk [vmem:[%s150 + $0x17] sm:$0x1] %vm244, %v833
        %849 = vst.msk [vmem:[%s150 + $0x27] sm:$0x1] %vm244, %v834
        %850 = vst.msk [vmem:[%s150 + $0x37] sm:$0x1] %vm244, %v835
        %851 = vst.msk [vmem:[%s150 + $0x47] sm:$0x1] %vm244, %v836
        %852 = vst.msk [vmem:[%s150 + $0x57] sm:$0x1] %vm244, %v837
        %853 = vst.msk [vmem:[%s150 + $0x67] sm:$0x1] %vm244, %v838
        %854 = vst.msk [vmem:[%s150 + $0x77] sm:$0x1] %vm244, %v839
        %v855 = vld [vmem:[%s687] sm:$0xf]
        %v856 = vld [vmem:[%s773] sm:$0xf]
        %s857 = sadd.s32 %s158, 10
        %s858 = smul.addr %s857, 4
        %s859 = scalar_lea.vmem %s155, %s858
        %v860 = vld [vmem:[%s859] sm:$0xf]
        %v862 = vunpack.c.l.b16 %v855
        %v863 = vpack.c.b16 %v862, %v862
        %864 = vrot.lane.b32.xlu0 %v863, 127
        %v865 = vpop.permute.xlu0 %864
        %866 = vrot.lane.b32.xlu0 %v863, 126
        %v867 = vpop.permute.xlu0 %866
        %v869 = vunpack.c.l.b16 %v856
        %v870 = vpack.c.b16 %v869, %v869
        %871 = vrot.lane.b32.xlu0 %v870, 127
        %v872 = vpop.permute.xlu0 %871
        %873 = vrot.lane.b32.xlu0 %v870, 126
        %v874 = vpop.permute.xlu0 %873
        %v876 = vunpack.c.l.b16 %v860
        %v877 = vpack.c.b16 %v876, %v876
        %878 = vrot.lane.b32.xlu0 %v877, 127
        %v879 = vpop.permute.xlu0 %878
        %880 = vrot.lane.b32.xlu0 %v877, 126
        %v881 = vpop.permute.xlu0 %880
        %v884 = vsel %vm191, %v855, %v865
        %v888 = vsel %vm191, %v867, %v870
        %v892 = vsel %vm191, %v872, %v874
        %v896 = vsel %vm191, %v860, %v879
        %v898 = vld [vmem:[%s1] sm:$0xf]
        %v900 = vsel %vm209, %v898, 0
        %v903 = vsel %vm191, %v881, 0
        %905 = vmatpush.bf16.msra.mxu0 0
        %906 = vmatpush.bf16.msra.mxu0 0
        %907 = vmatpush.bf16.msra.mxu0 0
        %908 = vmatpush.bf16.msra.mxu0 %v903
        %909 = vmatpush.bf16.msra.mxu0 %v896
        %910 = vmatpush.bf16.msra.mxu0 %v892
        %911 = vmatpush.bf16.msra.mxu0 %v888
        %912 = vmatpush.bf16.msra.mxu0 %v884
        %913 = vmatmul.bf16.gmra.mxu0 %v900
        %v914 = vpop.f32.mrf.mxu0
        %v915 = vadd.f32 0.0, %v914
        %v916 = vpop.f32.mrf.mxu0
        %917 = vdwg.mxu0
        %v919 = vrot.slane %v915, 1
        %v920 = vrot.slane %v915, 2
        %v921 = vrot.slane %v915, 3
        %v922 = vrot.slane %v915, 4
        %v923 = vrot.slane %v915, 5
        %v924 = vrot.slane %v915, 6
        %v925 = vrot.slane %v915, 7
        %933 = vst.msk [vmem:[%s150 + $0x8] sm:$0x1] %vm244, %v915
        %934 = vst.msk [vmem:[%s150 + $0x18] sm:$0x1] %vm244, %v919
        %935 = vst.msk [vmem:[%s150 + $0x28] sm:$0x1] %vm244, %v920
        %936 = vst.msk [vmem:[%s150 + $0x38] sm:$0x1] %vm244, %v921
        %937 = vst.msk [vmem:[%s150 + $0x48] sm:$0x1] %vm244, %v922
        %938 = vst.msk [vmem:[%s150 + $0x58] sm:$0x1] %vm244, %v923
        %939 = vst.msk [vmem:[%s150 + $0x68] sm:$0x1] %vm244, %v924
        %940 = vst.msk [vmem:[%s150 + $0x78] sm:$0x1] %vm244, %v925
        %v941 = vld [vmem:[%s773] sm:$0xf]
        %v942 = vld [vmem:[%s859] sm:$0xf]
        %s943 = sadd.s32 %s158, 11
        %s944 = smul.addr %s943, 4
        %s945 = scalar_lea.vmem %s155, %s944
        %v946 = vld [vmem:[%s945] sm:$0xf]
        %v948 = vunpack.c.l.b16 %v941
        %v949 = vpack.c.b16 %v948, %v948
        %950 = vrot.lane.b32.xlu0 %v949, 127
        %v951 = vpop.permute.xlu0 %950
        %952 = vrot.lane.b32.xlu0 %v949, 126
        %v953 = vpop.permute.xlu0 %952
        %v955 = vunpack.c.l.b16 %v942
        %v956 = vpack.c.b16 %v955, %v955
        %957 = vrot.lane.b32.xlu0 %v956, 127
        %v958 = vpop.permute.xlu0 %957
        %959 = vrot.lane.b32.xlu0 %v956, 126
        %v960 = vpop.permute.xlu0 %959
        %v962 = vunpack.c.l.b16 %v946
        %v963 = vpack.c.b16 %v962, %v962
        %964 = vrot.lane.b32.xlu0 %v963, 127
        %v965 = vpop.permute.xlu0 %964
        %966 = vrot.lane.b32.xlu0 %v963, 126
        %v967 = vpop.permute.xlu0 %966
        %v970 = vsel %vm191, %v941, %v951
        %v974 = vsel %vm191, %v953, %v956
        %v978 = vsel %vm191, %v958, %v960
        %v982 = vsel %vm191, %v946, %v965
        %v984 = vld [vmem:[%s1] sm:$0xf]
        %v986 = vsel %vm209, %v984, 0
        %v989 = vsel %vm191, %v967, 0
        %991 = vmatpush.bf16.msra.mxu0 0
        %992 = vmatpush.bf16.msra.mxu0 0
        %993 = vmatpush.bf16.msra.mxu0 0
        %994 = vmatpush.bf16.msra.mxu0 %v989
        %995 = vmatpush.bf16.msra.mxu0 %v982
        %996 = vmatpush.bf16.msra.mxu0 %v978
        %997 = vmatpush.bf16.msra.mxu0 %v974
        %998 = vmatpush.bf16.msra.mxu0 %v970
        %999 = vmatmul.bf16.gmra.mxu0 %v986
        %v1000 = vpop.f32.mrf.mxu0
        %v1001 = vadd.f32 0.0, %v1000
        %v1002 = vpop.f32.mrf.mxu0
        %1003 = vdwg.mxu0
        %v1005 = vrot.slane %v1001, 1
        %v1006 = vrot.slane %v1001, 2
        %v1007 = vrot.slane %v1001, 3
        %v1008 = vrot.slane %v1001, 4
        %v1009 = vrot.slane %v1001, 5
        %v1010 = vrot.slane %v1001, 6
        %v1011 = vrot.slane %v1001, 7
        %1019 = vst.msk [vmem:[%s150 + $0x9] sm:$0x1] %vm244, %v1001
        %1020 = vst.msk [vmem:[%s150 + $0x19] sm:$0x1] %vm244, %v1005
        %1021 = vst.msk [vmem:[%s150 + $0x29] sm:$0x1] %vm244, %v1006
        %1022 = vst.msk [vmem:[%s150 + $0x39] sm:$0x1] %vm244, %v1007
        %1023 = vst.msk [vmem:[%s150 + $0x49] sm:$0x1] %vm244, %v1008
        %1024 = vst.msk [vmem:[%s150 + $0x59] sm:$0x1] %vm244, %v1009
        %1025 = vst.msk [vmem:[%s150 + $0x69] sm:$0x1] %vm244, %v1010
        %1026 = vst.msk [vmem:[%s150 + $0x79] sm:$0x1] %vm244, %v1011
        %v1027 = vld [vmem:[%s859] sm:$0xf]
        %v1028 = vld [vmem:[%s945] sm:$0xf]
        %s1029 = sadd.s32 %s158, 12
        %s1030 = smul.addr %s1029, 4
        %s1031 = scalar_lea.vmem %s155, %s1030
        %v1032 = vld [vmem:[%s1031] sm:$0xf]
        %v1034 = vunpack.c.l.b16 %v1027
        %v1035 = vpack.c.b16 %v1034, %v1034
        %1036 = vrot.lane.b32.xlu0 %v1035, 127
        %v1037 = vpop.permute.xlu0 %1036
        %1038 = vrot.lane.b32.xlu0 %v1035, 126
        %v1039 = vpop.permute.xlu0 %1038
        %v1041 = vunpack.c.l.b16 %v1028
        %v1042 = vpack.c.b16 %v1041, %v1041
        %1043 = vrot.lane.b32.xlu0 %v1042, 127
        %v1044 = vpop.permute.xlu0 %1043
        %1045 = vrot.lane.b32.xlu0 %v1042, 126
        %v1046 = vpop.permute.xlu0 %1045
        %v1048 = vunpack.c.l.b16 %v1032
        %v1049 = vpack.c.b16 %v1048, %v1048
        %1050 = vrot.lane.b32.xlu0 %v1049, 127
        %v1051 = vpop.permute.xlu0 %1050
        %1052 = vrot.lane.b32.xlu0 %v1049, 126
        %v1053 = vpop.permute.xlu0 %1052
        %v1056 = vsel %vm191, %v1027, %v1037
        %v1060 = vsel %vm191, %v1039, %v1042
        %v1064 = vsel %vm191, %v1044, %v1046
        %v1068 = vsel %vm191, %v1032, %v1051
        %v1070 = vld [vmem:[%s1] sm:$0xf]
        %v1072 = vsel %vm209, %v1070, 0
        %v1075 = vsel %vm191, %v1053, 0
        %1077 = vmatpush.bf16.msra.mxu0 0
        %1078 = vmatpush.bf16.msra.mxu0 0
        %1079 = vmatpush.bf16.msra.mxu0 0
        %1080 = vmatpush.bf16.msra.mxu0 %v1075
        %1081 = vmatpush.bf16.msra.mxu0 %v1068
        %1082 = vmatpush.bf16.msra.mxu0 %v1064
        %1083 = vmatpush.bf16.msra.mxu0 %v1060
        %1084 = vmatpush.bf16.msra.mxu0 %v1056
        %1085 = vmatmul.bf16.gmra.mxu0 %v1072
        %v1086 = vpop.f32.mrf.mxu0
        %v1087 = vadd.f32 0.0, %v1086
        %v1088 = vpop.f32.mrf.mxu0
        %1089 = vdwg.mxu0
        %v1091 = vrot.slane %v1087, 1
        %v1092 = vrot.slane %v1087, 2
        %v1093 = vrot.slane %v1087, 3
        %v1094 = vrot.slane %v1087, 4
        %v1095 = vrot.slane %v1087, 5
        %v1096 = vrot.slane %v1087, 6
        %v1097 = vrot.slane %v1087, 7
        %1105 = vst.msk [vmem:[%s150 + $0xa] sm:$0x1] %vm244, %v1087
        %1106 = vst.msk [vmem:[%s150 + $0x1a] sm:$0x1] %vm244, %v1091
        %1107 = vst.msk [vmem:[%s150 + $0x2a] sm:$0x1] %vm244, %v1092
        %1108 = vst.msk [vmem:[%s150 + $0x3a] sm:$0x1] %vm244, %v1093
        %1109 = vst.msk [vmem:[%s150 + $0x4a] sm:$0x1] %vm244, %v1094
        %1110 = vst.msk [vmem:[%s150 + $0x5a] sm:$0x1] %vm244, %v1095
        %1111 = vst.msk [vmem:[%s150 + $0x6a] sm:$0x1] %vm244, %v1096
        %1112 = vst.msk [vmem:[%s150 + $0x7a] sm:$0x1] %vm244, %v1097
        %v1113 = vld [vmem:[%s945] sm:$0xf]
        %v1114 = vld [vmem:[%s1031] sm:$0xf]
        %s1115 = sadd.s32 %s158, 13
        %s1116 = smul.addr %s1115, 4
        %s1117 = scalar_lea.vmem %s155, %s1116
        %v1118 = vld [vmem:[%s1117] sm:$0xf]
        %v1120 = vunpack.c.l.b16 %v1113
        %v1121 = vpack.c.b16 %v1120, %v1120
        %1122 = vrot.lane.b32.xlu0 %v1121, 127
        %v1123 = vpop.permute.xlu0 %1122
        %1124 = vrot.lane.b32.xlu0 %v1121, 126
        %v1125 = vpop.permute.xlu0 %1124
        %v1127 = vunpack.c.l.b16 %v1114
        %v1128 = vpack.c.b16 %v1127, %v1127
        %1129 = vrot.lane.b32.xlu0 %v1128, 127
        %v1130 = vpop.permute.xlu0 %1129
        %1131 = vrot.lane.b32.xlu0 %v1128, 126
        %v1132 = vpop.permute.xlu0 %1131
        %v1134 = vunpack.c.l.b16 %v1118
        %v1135 = vpack.c.b16 %v1134, %v1134
        %1136 = vrot.lane.b32.xlu0 %v1135, 127
        %v1137 = vpop.permute.xlu0 %1136
        %1138 = vrot.lane.b32.xlu0 %v1135, 126
        %v1139 = vpop.permute.xlu0 %1138
        %v1142 = vsel %vm191, %v1113, %v1123
        %v1146 = vsel %vm191, %v1125, %v1128
        %v1150 = vsel %vm191, %v1130, %v1132
        %v1154 = vsel %vm191, %v1118, %v1137
        %v1156 = vld [vmem:[%s1] sm:$0xf]
        %v1158 = vsel %vm209, %v1156, 0
        %v1161 = vsel %vm191, %v1139, 0
        %1163 = vmatpush.bf16.msra.mxu0 0
        %1164 = vmatpush.bf16.msra.mxu0 0
        %1165 = vmatpush.bf16.msra.mxu0 0
        %1166 = vmatpush.bf16.msra.mxu0 %v1161
        %1167 = vmatpush.bf16.msra.mxu0 %v1154
        %1168 = vmatpush.bf16.msra.mxu0 %v1150
        %1169 = vmatpush.bf16.msra.mxu0 %v1146
        %1170 = vmatpush.bf16.msra.mxu0 %v1142
        %1171 = vmatmul.bf16.gmra.mxu0 %v1158
        %v1172 = vpop.f32.mrf.mxu0
        %v1173 = vadd.f32 0.0, %v1172
        %v1174 = vpop.f32.mrf.mxu0
        %1175 = vdwg.mxu0
        %v1177 = vrot.slane %v1173, 1
        %v1178 = vrot.slane %v1173, 2
        %v1179 = vrot.slane %v1173, 3
        %v1180 = vrot.slane %v1173, 4
        %v1181 = vrot.slane %v1173, 5
        %v1182 = vrot.slane %v1173, 6
        %v1183 = vrot.slane %v1173, 7
        %1191 = vst.msk [vmem:[%s150 + $0xb] sm:$0x1] %vm244, %v1173
        %1192 = vst.msk [vmem:[%s150 + $0x1b] sm:$0x1] %vm244, %v1177
        %1193 = vst.msk [vmem:[%s150 + $0x2b] sm:$0x1] %vm244, %v1178
        %1194 = vst.msk [vmem:[%s150 + $0x3b] sm:$0x1] %vm244, %v1179
        %1195 = vst.msk [vmem:[%s150 + $0x4b] sm:$0x1] %vm244, %v1180
        %1196 = vst.msk [vmem:[%s150 + $0x5b] sm:$0x1] %vm244, %v1181
        %1197 = vst.msk [vmem:[%s150 + $0x6b] sm:$0x1] %vm244, %v1182
        %1198 = vst.msk [vmem:[%s150 + $0x7b] sm:$0x1] %vm244, %v1183
        %v1199 = vld [vmem:[%s1031] sm:$0xf]
        %v1200 = vld [vmem:[%s1117] sm:$0xf]
        %s1201 = sadd.s32 %s158, 14
        %s1202 = smul.addr %s1201, 4
        %s1203 = scalar_lea.vmem %s155, %s1202
        %v1204 = vld [vmem:[%s1203] sm:$0xf]
        %v1206 = vunpack.c.l.b16 %v1199
        %v1207 = vpack.c.b16 %v1206, %v1206
        %1208 = vrot.lane.b32.xlu0 %v1207, 127
        %v1209 = vpop.permute.xlu0 %1208
        %1210 = vrot.lane.b32.xlu0 %v1207, 126
        %v1211 = vpop.permute.xlu0 %1210
        %v1213 = vunpack.c.l.b16 %v1200
        %v1214 = vpack.c.b16 %v1213, %v1213
        %1215 = vrot.lane.b32.xlu0 %v1214, 127
        %v1216 = vpop.permute.xlu0 %1215
        %1217 = vrot.lane.b32.xlu0 %v1214, 126
        %v1218 = vpop.permute.xlu0 %1217
        %v1220 = vunpack.c.l.b16 %v1204
        %v1221 = vpack.c.b16 %v1220, %v1220
        %1222 = vrot.lane.b32.xlu0 %v1221, 127
        %v1223 = vpop.permute.xlu0 %1222
        %1224 = vrot.lane.b32.xlu0 %v1221, 126
        %v1225 = vpop.permute.xlu0 %1224
        %v1228 = vsel %vm191, %v1199, %v1209
        %v1232 = vsel %vm191, %v1211, %v1214
        %v1236 = vsel %vm191, %v1216, %v1218
        %v1240 = vsel %vm191, %v1204, %v1223
        %v1242 = vld [vmem:[%s1] sm:$0xf]
        %v1244 = vsel %vm209, %v1242, 0
        %v1247 = vsel %vm191, %v1225, 0
        %1249 = vmatpush.bf16.msra.mxu0 0
        %1250 = vmatpush.bf16.msra.mxu0 0
        %1251 = vmatpush.bf16.msra.mxu0 0
        %1252 = vmatpush.bf16.msra.mxu0 %v1247
        %1253 = vmatpush.bf16.msra.mxu0 %v1240
        %1254 = vmatpush.bf16.msra.mxu0 %v1236
        %1255 = vmatpush.bf16.msra.mxu0 %v1232
        %1256 = vmatpush.bf16.msra.mxu0 %v1228
        %1257 = vmatmul.bf16.gmra.mxu0 %v1244
        %v1258 = vpop.f32.mrf.mxu0
        %v1259 = vadd.f32 0.0, %v1258
        %v1260 = vpop.f32.mrf.mxu0
        %1261 = vdwg.mxu0
        %v1263 = vrot.slane %v1259, 1
        %v1264 = vrot.slane %v1259, 2
        %v1265 = vrot.slane %v1259, 3
        %v1266 = vrot.slane %v1259, 4
        %v1267 = vrot.slane %v1259, 5
        %v1268 = vrot.slane %v1259, 6
        %v1269 = vrot.slane %v1259, 7
        %1277 = vst.msk [vmem:[%s150 + $0xc] sm:$0x1] %vm244, %v1259
        %1278 = vst.msk [vmem:[%s150 + $0x1c] sm:$0x1] %vm244, %v1263
        %1279 = vst.msk [vmem:[%s150 + $0x2c] sm:$0x1] %vm244, %v1264
        %1280 = vst.msk [vmem:[%s150 + $0x3c] sm:$0x1] %vm244, %v1265
        %1281 = vst.msk [vmem:[%s150 + $0x4c] sm:$0x1] %vm244, %v1266
        %1282 = vst.msk [vmem:[%s150 + $0x5c] sm:$0x1] %vm244, %v1267
        %1283 = vst.msk [vmem:[%s150 + $0x6c] sm:$0x1] %vm244, %v1268
        %1284 = vst.msk [vmem:[%s150 + $0x7c] sm:$0x1] %vm244, %v1269
        %v1285 = vld [vmem:[%s1117] sm:$0xf]
        %v1286 = vld [vmem:[%s1203] sm:$0xf]
        %s1287 = sadd.s32 %s158, 15
        %s1288 = smul.addr %s1287, 4
        %s1289 = scalar_lea.vmem %s155, %s1288
        %v1290 = vld [vmem:[%s1289] sm:$0xf]
        %v1292 = vunpack.c.l.b16 %v1285
        %v1293 = vpack.c.b16 %v1292, %v1292
        %1294 = vrot.lane.b32.xlu0 %v1293, 127
        %v1295 = vpop.permute.xlu0 %1294
        %1296 = vrot.lane.b32.xlu0 %v1293, 126
        %v1297 = vpop.permute.xlu0 %1296
        %v1299 = vunpack.c.l.b16 %v1286
        %v1300 = vpack.c.b16 %v1299, %v1299
        %1301 = vrot.lane.b32.xlu0 %v1300, 127
        %v1302 = vpop.permute.xlu0 %1301
        %1303 = vrot.lane.b32.xlu0 %v1300, 126
        %v1304 = vpop.permute.xlu0 %1303
        %v1306 = vunpack.c.l.b16 %v1290
        %v1307 = vpack.c.b16 %v1306, %v1306
        %1308 = vrot.lane.b32.xlu0 %v1307, 127
        %v1309 = vpop.permute.xlu0 %1308
        %1310 = vrot.lane.b32.xlu0 %v1307, 126
        %v1311 = vpop.permute.xlu0 %1310
        %v1314 = vsel %vm191, %v1285, %v1295
        %v1318 = vsel %vm191, %v1297, %v1300
        %v1322 = vsel %vm191, %v1302, %v1304
        %v1326 = vsel %vm191, %v1290, %v1309
        %v1328 = vld [vmem:[%s1] sm:$0xf]
        %v1330 = vsel %vm209, %v1328, 0
        %v1333 = vsel %vm191, %v1311, 0
        %1335 = vmatpush.bf16.msra.mxu0 0
        %1336 = vmatpush.bf16.msra.mxu0 0
        %1337 = vmatpush.bf16.msra.mxu0 0
        %1338 = vmatpush.bf16.msra.mxu0 %v1333
        %1339 = vmatpush.bf16.msra.mxu0 %v1326
        %1340 = vmatpush.bf16.msra.mxu0 %v1322
        %1341 = vmatpush.bf16.msra.mxu0 %v1318
        %1342 = vmatpush.bf16.msra.mxu0 %v1314
        %1343 = vmatmul.bf16.gmra.mxu0 %v1330
        %v1344 = vpop.f32.mrf.mxu0
        %v1345 = vadd.f32 0.0, %v1344
        %v1346 = vpop.f32.mrf.mxu0
        %1347 = vdwg.mxu0
        %v1349 = vrot.slane %v1345, 1
        %v1350 = vrot.slane %v1345, 2
        %v1351 = vrot.slane %v1345, 3
        %v1352 = vrot.slane %v1345, 4
        %v1353 = vrot.slane %v1345, 5
        %v1354 = vrot.slane %v1345, 6
        %v1355 = vrot.slane %v1345, 7
        %1363 = vst.msk [vmem:[%s150 + $0xd] sm:$0x1] %vm244, %v1345
        %1364 = vst.msk [vmem:[%s150 + $0x1d] sm:$0x1] %vm244, %v1349
        %1365 = vst.msk [vmem:[%s150 + $0x2d] sm:$0x1] %vm244, %v1350
        %1366 = vst.msk [vmem:[%s150 + $0x3d] sm:$0x1] %vm244, %v1351
        %1367 = vst.msk [vmem:[%s150 + $0x4d] sm:$0x1] %vm244, %v1352
        %1368 = vst.msk [vmem:[%s150 + $0x5d] sm:$0x1] %vm244, %v1353
        %1369 = vst.msk [vmem:[%s150 + $0x6d] sm:$0x1] %vm244, %v1354
        %1370 = vst.msk [vmem:[%s150 + $0x7d] sm:$0x1] %vm244, %v1355
        %v1371 = vld [vmem:[%s1203] sm:$0xf]
        %v1372 = vld [vmem:[%s1289] sm:$0xf]
        %s1373 = sadd.s32 %s158, 16
        %s1374 = smul.addr %s1373, 4
        %s1375 = scalar_lea.vmem %s155, %s1374
        %v1376 = vld [vmem:[%s1375] sm:$0xf]
        %v1378 = vunpack.c.l.b16 %v1371
        %v1379 = vpack.c.b16 %v1378, %v1378
        %1380 = vrot.lane.b32.xlu0 %v1379, 127
        %v1381 = vpop.permute.xlu0 %1380
        %1382 = vrot.lane.b32.xlu0 %v1379, 126
        %v1383 = vpop.permute.xlu0 %1382
        %v1385 = vunpack.c.l.b16 %v1372
        %v1386 = vpack.c.b16 %v1385, %v1385
        %1387 = vrot.lane.b32.xlu0 %v1386, 127
        %v1388 = vpop.permute.xlu0 %1387
        %1389 = vrot.lane.b32.xlu0 %v1386, 126
        %v1390 = vpop.permute.xlu0 %1389
        %v1392 = vunpack.c.l.b16 %v1376
        %v1393 = vpack.c.b16 %v1392, %v1392
        %1394 = vrot.lane.b32.xlu0 %v1393, 127
        %v1395 = vpop.permute.xlu0 %1394
        %1396 = vrot.lane.b32.xlu0 %v1393, 126
        %v1397 = vpop.permute.xlu0 %1396
        %v1400 = vsel %vm191, %v1371, %v1381
        %v1404 = vsel %vm191, %v1383, %v1386
        %v1408 = vsel %vm191, %v1388, %v1390
        %v1412 = vsel %vm191, %v1376, %v1395
        %v1414 = vld [vmem:[%s1] sm:$0xf]
        %v1416 = vsel %vm209, %v1414, 0
        %v1419 = vsel %vm191, %v1397, 0
        %1421 = vmatpush.bf16.msra.mxu0 0
        %1422 = vmatpush.bf16.msra.mxu0 0
        %1423 = vmatpush.bf16.msra.mxu0 0
        %1424 = vmatpush.bf16.msra.mxu0 %v1419
        %1425 = vmatpush.bf16.msra.mxu0 %v1412
        %1426 = vmatpush.bf16.msra.mxu0 %v1408
        %1427 = vmatpush.bf16.msra.mxu0 %v1404
        %1428 = vmatpush.bf16.msra.mxu0 %v1400
        %1429 = vmatmul.bf16.gmra.mxu0 %v1416
        %v1430 = vpop.f32.mrf.mxu0
        %v1431 = vadd.f32 0.0, %v1430
        %v1432 = vpop.f32.mrf.mxu0
        %1433 = vdwg.mxu0
        %v1435 = vrot.slane %v1431, 1
        %v1436 = vrot.slane %v1431, 2
        %v1437 = vrot.slane %v1431, 3
        %v1438 = vrot.slane %v1431, 4
        %v1439 = vrot.slane %v1431, 5
        %v1440 = vrot.slane %v1431, 6
        %v1441 = vrot.slane %v1431, 7
        %1449 = vst.msk [vmem:[%s150 + $0xe] sm:$0x1] %vm244, %v1431
        %1450 = vst.msk [vmem:[%s150 + $0x1e] sm:$0x1] %vm244, %v1435
        %1451 = vst.msk [vmem:[%s150 + $0x2e] sm:$0x1] %vm244, %v1436
        %1452 = vst.msk [vmem:[%s150 + $0x3e] sm:$0x1] %vm244, %v1437
        %1453 = vst.msk [vmem:[%s150 + $0x4e] sm:$0x1] %vm244, %v1438
        %1454 = vst.msk [vmem:[%s150 + $0x5e] sm:$0x1] %vm244, %v1439
        %1455 = vst.msk [vmem:[%s150 + $0x6e] sm:$0x1] %vm244, %v1440
        %1456 = vst.msk [vmem:[%s150 + $0x7e] sm:$0x1] %vm244, %v1441
        %v1457 = vld [vmem:[%s1289] sm:$0xf]
        %v1458 = vld [vmem:[%s1375] sm:$0xf]
        %s1459 = sadd.s32 %s158, 17
        %s1460 = smul.addr %s1459, 4
        %s1461 = scalar_lea.vmem %s155, %s1460
        %v1462 = vld [vmem:[%s1461] sm:$0xf]
        %v1464 = vunpack.c.l.b16 %v1457
        %v1465 = vpack.c.b16 %v1464, %v1464
        %1466 = vrot.lane.b32.xlu0 %v1465, 127
        %v1467 = vpop.permute.xlu0 %1466
        %1468 = vrot.lane.b32.xlu0 %v1465, 126
        %v1469 = vpop.permute.xlu0 %1468
        %v1471 = vunpack.c.l.b16 %v1458
        %v1472 = vpack.c.b16 %v1471, %v1471
        %1473 = vrot.lane.b32.xlu0 %v1472, 127
        %v1474 = vpop.permute.xlu0 %1473
        %1475 = vrot.lane.b32.xlu0 %v1472, 126
        %v1476 = vpop.permute.xlu0 %1475
        %v1478 = vunpack.c.l.b16 %v1462
        %v1479 = vpack.c.b16 %v1478, %v1478
        %1480 = vrot.lane.b32.xlu0 %v1479, 127
        %v1481 = vpop.permute.xlu0 %1480
        %1482 = vrot.lane.b32.xlu0 %v1479, 126
        %v1483 = vpop.permute.xlu0 %1482
        %v1486 = vsel %vm191, %v1457, %v1467
        %v1490 = vsel %vm191, %v1469, %v1472
        %v1494 = vsel %vm191, %v1474, %v1476
        %v1498 = vsel %vm191, %v1462, %v1481
        %v1500 = vld [vmem:[%s1] sm:$0xf]
        %v1502 = vsel %vm209, %v1500, 0
        %v1505 = vsel %vm191, %v1483, 0
        %1507 = vmatpush.bf16.msra.mxu0 0
        %1508 = vmatpush.bf16.msra.mxu0 0
        %1509 = vmatpush.bf16.msra.mxu0 0
        %1510 = vmatpush.bf16.msra.mxu0 %v1505
        %1511 = vmatpush.bf16.msra.mxu0 %v1498
        %1512 = vmatpush.bf16.msra.mxu0 %v1494
        %1513 = vmatpush.bf16.msra.mxu0 %v1490
        %1514 = vmatpush.bf16.msra.mxu0 %v1486
        %1515 = vmatmul.bf16.gmra.mxu0 %v1502
        %v1516 = vpop.f32.mrf.mxu0
        %v1517 = vadd.f32 0.0, %v1516
        %v1518 = vpop.f32.mrf.mxu0
        %1519 = vdwg.mxu0
        %v1521 = vrot.slane %v1517, 1
        %v1522 = vrot.slane %v1517, 2
        %v1523 = vrot.slane %v1517, 3
        %v1524 = vrot.slane %v1517, 4
        %v1525 = vrot.slane %v1517, 5
        %v1526 = vrot.slane %v1517, 6
        %v1527 = vrot.slane %v1517, 7
        %1535 = vst.msk [vmem:[%s150 + $0xf] sm:$0x1] %vm244, %v1517
        %1536 = vst.msk [vmem:[%s150 + $0x1f] sm:$0x1] %vm244, %v1521
        %1537 = vst.msk [vmem:[%s150 + $0x2f] sm:$0x1] %vm244, %v1522
        %1538 = vst.msk [vmem:[%s150 + $0x3f] sm:$0x1] %vm244, %v1523
        %1539 = vst.msk [vmem:[%s150 + $0x4f] sm:$0x1] %vm244, %v1524
        %1540 = vst.msk [vmem:[%s150 + $0x5f] sm:$0x1] %vm244, %v1525
        %1541 = vst.msk [vmem:[%s150 + $0x6f] sm:$0x1] %vm244, %v1526
        %1542 = vst.msk [vmem:[%s150 + $0x7f] sm:$0x1] %vm244, %v1527
        %s1543 = sand.u32 %s85, 1
        %s1544 = scalar_lea.sflag [#allocation3], %s1543
        %s1545 = sand.u32 %s85, 1
        %s1546 = smul.addr %s1545, 128
        %s1547 = scalar_lea.vmem [#allocation2], %s1546
        // Predicated region
        $region29: #{conv2d_forward.1} parent=27 // pred_check
          %p1548 = pneg %p95
        $region30: #{conv2d_forward.1} parent=27 // pred_check_branch
          %1550 = sbr.rel (%p1548) target = $region32
        $region31: #{conv2d_forward.1} parent=27 // pred_region
          %s1551 = smul.u32 2, %s21
          %1553 = vsyncadd %s1544, 0
          %s1554 = smul.addr %s20, 16
          %s1555 = sadd.s32 %s1551, %s1554
          %s1556 = smul.addr %s1555, 8
          %s1557 = scalar_lea.hbm %s2, %s1556
          %s1558 = sshll.u32 %s1547, 4
          %s1559 = int_to_ptr.vmem [resolvable:$true] %s1558
          %s1560 = sshll.u32 %s1557, 4
          %s1561 = int_to_ptr.hbm [resolvable:$true] %s1560
          %1566 = dma.vmem_to_hbm [thread:$0]  %s1559, 2048, %s1561, %s1544, 128, 128, 8
        $region32: #{conv2d_forward.1} parent=27 // pred_fallthru
          _
      $region28: #{conv2d_forward.1} parent=5 // pred_fallthru
        _
      %p1567 = scmp.le.s32.totalorder 2, %s11
      // Predicated region
      $region33: #{conv2d_forward.1} parent=5 // pred_check
        %p1568 = pneg %p1567
      $region34: #{conv2d_forward.1} parent=5 // pred_check_branch
        %1570 = sbr.rel (%p1568) target = $region36
      $region35: #{conv2d_forward.1} parent=5 // pred_region
        %s1571 = ssub.s32 %s11, 2
        // Predicated region
        $region37: #{conv2d_forward.1} parent=35 // pred_check
          %p1572 = pneg %p101
        $region38: #{conv2d_forward.1} parent=35 // pred_check_branch
          %1574 = sbr.rel (%p1572) target = $region40
        $region39: #{conv2d_forward.1} parent=35 // pred_region
          %s1575 = sand.u32 %s86, 1
          %s1576 = scalar_lea.sflag [#allocation3], %s1575
          %s1577 = sand.u32 %s86, 1
          %s1578 = smul.addr %s1577, 128
          %s1579 = scalar_lea.vmem [#allocation2], %s1578
          %1581 = dma.done %s1576, 2048
        $region40: #{conv2d_forward.1} parent=35 // pred_fallthru
          _
      $region36: #{conv2d_forward.1} parent=5 // pred_fallthru
        _
    $region6: #{conv2d_forward.1} parent=1 // loop_footer
      %s15 = sadd.s32 1, %s11
    $region7: #{conv2d_forward.1} parent=1 // loop_footer_branch
      %10 = sbr.rel target = $region3
    $region8: #{conv2d_forward.1} parent=1 // loop_exit
      _
    %1582 = vsyncpa [#allocation3], 1
    %s1583 = scalar_lea.sflag [#allocation3], 1
    %1584 = vsyncpa %s1583, 1

</llo_original>
